<compile_context>
chip_gen: v7x
topology: tpu7x:2x2x1
jax: 0.10.0
libtpu: 0.0.40
codegen_flags: <defaults>
</compile_context>

<pallas_src>
import functools

import jax
import jax.numpy as jnp
from jax import lax
from jax.experimental import pallas as pl
from jax.experimental.pallas import tpu as pltpu


# ----------------------------------------------------------------------------
# Pallas kernel: full forward pass for one batch tile (TB samples)
# ----------------------------------------------------------------------------
def qnet_kernel(x_ref, w1_ref, b1_ref, w2_ref, b2_ref,
                wl1_ref, bl1_ref, wl2_ref, bl2_ref, wl3_ref, bl3_ref,
                out_ref, *, batch_tile, ksize=3):
    TB = batch_tile
    H2 = wl1_ref.shape[0]            # conv2 output rows per sample
    H1 = H2 + (ksize - 1)            # conv1 output rows per sample
    W2C = wl1_ref.shape[1]

    # ---- conv1: 3 per-dy banded matmuls over contiguous row slabs (K=W*C) ---
    xv = x_ref[...]                                             # (TB*H, W*C) bf16
    acc1 = jnp.dot(xv[0:TB * H1, :], w1_ref[0],
                   preferred_element_type=jnp.float32)          # (TB*H1, W1*C)
    for dy in range(1, ksize):
        acc1 += jnp.dot(xv[dy * TB:dy * TB + TB * H1, :], w1_ref[dy],
                        preferred_element_type=jnp.float32)
    # bias + ReLU in f32, then cast to bf16 ONCE (slices below reuse the copy)
    h1 = jnp.maximum(acc1 + b1_ref[...], 0.0).astype(jnp.bfloat16)

    # ---- conv2: same structure (K = W1*C) -----------------------------------
    acc2 = jnp.dot(h1[0:TB * H2, :], w2_ref[0],
                   preferred_element_type=jnp.float32)          # (TB*H2, W2*C)
    for dy in range(1, ksize):
        acc2 += jnp.dot(h1[dy * TB:dy * TB + TB * H2, :], w2_ref[dy],
                        preferred_element_type=jnp.float32)
    h2 = jnp.maximum(acc2 + b2_ref[...], 0.0)                   # f32

    # ---- fc1 (flatten -> 120): one batched dot_general + leading-dim reduce -
    # (TB is a multiple of 8, so the sublane split reshape is layout-free.)
    h2b = h2.reshape(H2, TB, W2C).astype(jnp.bfloat16)          # cast once
    z1 = lax.dot_general(h2b, wl1_ref[...],
                         dimension_numbers=(((2,), (1,)), ((0,), (0,))),
                         preferred_element_type=jnp.float32)    # (H2, TB, 120)
    z1 = jnp.maximum(jnp.sum(z1, axis=0) + bl1_ref[...], 0.0)   # (TB, 120) f32

    # ---- fc2 / fc3; single output store -------------------------------------
    z2 = jnp.maximum(
        jnp.dot(z1.astype(jnp.bfloat16), wl2_ref[...],
                preferred_element_type=jnp.float32) + bl2_ref[...], 0.0)
    out_ref[...] = (jnp.dot(z2.astype(jnp.bfloat16), wl3_ref[...],
                            preferred_element_type=jnp.float32)
                    + bl3_ref[...])                             # (TB, A) f32


# ----------------------------------------------------------------------------
# One-time parameter packing (call at parameter-update time, NOT per step)
# ----------------------------------------------------------------------------
def _banded_taps_per_dy(w, w_in):
    """w: (C_out, C_in, K, K) torch conv weight ->
       (K, w_in*C_in, w_out*C_out): one banded lane matrix per dy tap row that
       folds the K dx taps (out lane x1*C+co <- in lane (x1+dx)*C+ci)."""
    c_out, c_in, k, _ = w.shape
    w_out = w_in - (k - 1)
    mats = []
    for dy in range(k):
        m = jnp.zeros((w_in * c_in, w_out * c_out), w.dtype)
        for dx in range(k):
            sel = jnp.eye(w_in, w_out, k=-dx, dtype=w.dtype)    # row = col + dx
            m = m + jnp.kron(sel, w[:, :, dy, dx].T)            # (C_in,C_out) blocks
        mats.append(m)
    return jnp.stack(mats)                                      # (K, w_in*C, w_out*C)


def pack_params(params, obs_hw):
    """Torch-layout params -> lane-interleaved, bf16 MXU operands (f32 biases)."""
    H, W = obs_hw
    w1, b1, w2, b2, wl1, bl1, wl2, bl2, wl3, bl3 = params
    C = w1.shape[0]
    H1, W1 = H - 2, W - 2
    H2, W2 = H1 - 2, W1 - 2
    bf = jnp.bfloat16

    w1_pack = _banded_taps_per_dy(w1, W).astype(bf)             # (3, W*C,  W1*C)
    w2_pack = _banded_taps_per_dy(w2, W1).astype(bf)            # (3, W1*C, W2*C)
    b1_row = jnp.tile(b1, W1)[None, :].astype(jnp.float32)      # (1, W1*C)
    b2_row = jnp.tile(b2, W2)[None, :].astype(jnp.float32)      # (1, W2*C)

    # torch Linear weight (120, C*H2*W2), input flat index = c*H2*W2 + y2*W2 + x2
    # -> (H2, W2*C, 120) so lane index x2*C + c matches the conv output layout.
    F1 = wl1.shape[0]
    wl1_p = (wl1.T.reshape(C, H2, W2, F1)
             .transpose(1, 2, 0, 3)
             .reshape(H2, W2 * C, F1).astype(bf))

    return (w1_pack, b1_row, w2_pack, b2_row,
            wl1_p, bl1[None, :].astype(jnp.float32),
            wl2.T.astype(bf), bl2[None, :].astype(jnp.float32),
            wl3.T.astype(bf), bl3[None, :].astype(jnp.float32))


# ----------------------------------------------------------------------------
# Jitted wrapper (layout prep fuses; packing is cached outside)
# ----------------------------------------------------------------------------
def _round_up(v, m):
    return (v + m - 1) // m * m


@functools.partial(jax.jit, static_argnames=("action_dim", "batch_tile"))
def qnetwork_forward(x_nchw, packed, *, action_dim, batch_tile=256):
    if x_nchw.ndim == 3:                                        # unbatched (C,H,W)
        x_nchw = x_nchw[None]
    N, C, H, W = x_nchw.shape
    K = 3

    # Batch tile: multiple of 8 (sublane / bf16-pack friendly), capped so the
    # per-tile working set stays far below v7x's 64 MiB VMEM.
    TB = min(_round_up(max(N, 1), 8), _round_up(batch_tile, 8))
    N_pad = _round_up(N, TB)
    nt = N_pad // TB

    xp = x_nchw
    if N_pad != N:
        xp = jnp.pad(xp, ((0, N_pad - N), (0, 0), (0, 0), (0, 0)))

    # NCHW -> per-tile (y, i)-interleaved 2-D slab: row = (t*H + y)*TB + i,
    # lane = x*C + c.  No dy duplication; one fused layout op under jit.
    x_lay = (jnp.transpose(xp, (0, 2, 3, 1))                    # (N_pad, H, W, C)
             .reshape(nt, TB, H, W * C)
             .transpose(0, 2, 1, 3)                             # (nt, H, TB, W*C)
             .reshape(nt * H * TB, W * C)
             .astype(jnp.bfloat16))

    inputs = (x_lay,) + tuple(packed)

    def const_spec(a):
        return pl.BlockSpec(a.shape, lambda t, _n=a.ndim: (0,) * _n)

    in_specs = ([pl.BlockSpec((H * TB, W * C), lambda t: (t, 0))]
                + [const_spec(a) for a in inputs[1:]])

    out = pl.pallas_call(
        functools.partial(qnet_kernel, batch_tile=TB, ksize=K),
        out_shape=jax.ShapeDtypeStruct((N_pad, action_dim), jnp.float32),
        grid=(nt,),
        in_specs=in_specs,
        out_specs=pl.BlockSpec((TB, action_dim), lambda t: (t, 0)),
        compiler_params=pltpu.CompilerParams(
            dimension_semantics=("parallel",),      # batch tiles split across TCs
            vmem_limit_bytes=32 * 1024 * 1024),
    )(*inputs)
    return out[:N]


# ----------------------------------------------------------------------------
# Pure-JAX reference (matches the PyTorch module semantics)
# ----------------------------------------------------------------------------
def qnetwork_reference(x, params):
    w1, b1, w2, b2, wl1, bl1, wl2, bl2, wl3, bl3 = params
    dn = ("NCHW", "OIHW", "NCHW")
    h = lax.conv_general_dilated(x, w1, (1, 1), "VALID", dimension_numbers=dn)
    h = jnp.maximum(h + b1[None, :, None, None], 0.0)
    h = lax.conv_general_dilated(h, w2, (1, 1), "VALID", dimension_numbers=dn)
    h = jnp.maximum(h + b2[None, :, None, None], 0.0)
    flat = h.reshape(h.shape[0], -1)
    z = jnp.maximum(flat @ wl1.T + bl1, 0.0)
    z = jnp.maximum(z @ wl2.T + bl2, 0.0)
    return z @ wl3.T + bl3


# ----------------------------------------------------------------------------
if __name__ == "__main__":
    # observation_shape = (H, W, C) = (16, 16, 4); action_shape = 6
    N, C, H, W, A = 2, 4, 16, 16, 6
    flatten_dim = C * (H - 4) * (W - 4)                         # 576

    # deterministic synthetic parameters (torch layouts)
    pkeys = jax.random.split(jax.random.PRNGKey(1), 10)
    params = (
        0.10 * jax.random.normal(pkeys[0], (C, C, 3, 3), jnp.float32),   # conv1 w
        0.10 * jax.random.normal(pkeys[1], (C,), jnp.float32),           # conv1 b
        0.10 * jax.random.normal(pkeys[2], (C, C, 3, 3), jnp.float32),   # conv2 w
        0.10 * jax.random.normal(pkeys[3], (C,), jnp.float32),           # conv2 b
        0.05 * jax.random.normal(pkeys[4], (120, flatten_dim), jnp.float32),
        0.10 * jax.random.normal(pkeys[5], (120,), jnp.float32),
        0.10 * jax.random.normal(pkeys[6], (84, 120), jnp.float32),
        0.10 * jax.random.normal(pkeys[7], (84,), jnp.float32),
        0.10 * jax.random.normal(pkeys[8], (A, 84), jnp.float32),
        0.10 * jax.random.normal(pkeys[9], (A,), jnp.float32),
    )

    # deterministic input, NCHW like the PyTorch forward expects
    x = jax.random.normal(jax.random.PRNGKey(0), (N, C, H, W), jnp.float32)

    # Pack ONCE (parameter-update time), reuse across forward calls.
    packed = jax.block_until_ready(pack_params(params, (H, W)))

    out = qnetwork_forward(x, packed, action_dim=A)
    out = jax.block_until_ready(out)

    ref = qnetwork_reference(x, params)
    assert out.shape == (N, A)
    assert jnp.allclose(out, ref, rtol=3e-2, atol=3e-2), (
        f"mismatch: max abs err = {jnp.max(jnp.abs(out - ref))}")

    print("KERNEL_OK")
</pallas_src>

<mosaic_0001>
module attributes {stable_mosaic.version = 11 : i64} {
  func.func @qnet_kernel(%arg0: i32, %arg1: memref<128x64xbf16, #tpu.memory_space<vmem>>, %arg2: memref<3x64x56xbf16, #tpu.memory_space<vmem>>, %arg3: memref<1x56xf32, #tpu.memory_space<vmem>>, %arg4: memref<3x56x48xbf16, #tpu.memory_space<vmem>>, %arg5: memref<1x48xf32, #tpu.memory_space<vmem>>, %arg6: memref<12x48x120xbf16, #tpu.memory_space<vmem>>, %arg7: memref<1x120xf32, #tpu.memory_space<vmem>>, %arg8: memref<120x84xbf16, #tpu.memory_space<vmem>>, %arg9: memref<1x84xf32, #tpu.memory_space<vmem>>, %arg10: memref<84x6xbf16, #tpu.memory_space<vmem>>, %arg11: memref<1x6xf32, #tpu.memory_space<vmem>>, %arg12: memref<8x6xf32, #tpu.memory_space<vmem>>) attributes {dimension_semantics = [#tpu.dimension_semantics<parallel>], iteration_bounds = array<i64: 1>, scalar_prefetch = 0 : i64, scratch_operands = 0 : i64, tpu.core_type = #tpu.core_type<tc>, window_params = [{transform_indices = @transform_0, window_bounds = array<i64: 128, 64>}, {pipeline_mode = #tpu.pipeline_mode<synchronous>, transform_indices = @transform_1, window_bounds = array<i64: 3, 64, 56>}, {pipeline_mode = #tpu.pipeline_mode<synchronous>, transform_indices = @transform_2, window_bounds = array<i64: 1, 56>}, {pipeline_mode = #tpu.pipeline_mode<synchronous>, transform_indices = @transform_3, window_bounds = array<i64: 3, 56, 48>}, {pipeline_mode = #tpu.pipeline_mode<synchronous>, transform_indices = @transform_4, window_bounds = array<i64: 1, 48>}, {pipeline_mode = #tpu.pipeline_mode<synchronous>, transform_indices = @transform_5, window_bounds = array<i64: 12, 48, 120>}, {pipeline_mode = #tpu.pipeline_mode<synchronous>, transform_indices = @transform_6, window_bounds = array<i64: 1, 120>}, {pipeline_mode = #tpu.pipeline_mode<synchronous>, transform_indices = @transform_7, window_bounds = array<i64: 120, 84>}, {pipeline_mode = #tpu.pipeline_mode<synchronous>, transform_indices = @transform_8, window_bounds = array<i64: 1, 84>}, {pipeline_mode = #tpu.pipeline_mode<synchronous>, transform_indices = @transform_9, window_bounds = array<i64: 84, 6>}, {pipeline_mode = #tpu.pipeline_mode<synchronous>, transform_indices = @transform_10, window_bounds = array<i64: 1, 6>}, {transform_indices = @transform_11, window_bounds = array<i64: 8, 6>}]} {
    %c0 = arith.constant 0 : index
    %c0_0 = arith.constant 0 : index
    %0 = vector.load %arg1[%c0, %c0_0] : memref<128x64xbf16, #tpu.memory_space<vmem>>, vector<128x64xbf16>
    %1 = vector.extract_strided_slice %0 {offsets = [0, 0], sizes = [112, 64], strides = [1, 1]} : vector<128x64xbf16> to vector<112x64xbf16>
    %c0_1 = arith.constant 0 : index
    %c0_2 = arith.constant 0 : index
    %c0_3 = arith.constant 0 : index
    %2 = vector.load %arg2[%c0_1, %c0_2, %c0_3] : memref<3x64x56xbf16, #tpu.memory_space<vmem>>, vector<1x64x56xbf16>
    %3 = vector.shape_cast %2 : vector<1x64x56xbf16> to vector<64x56xbf16>
    %cst = arith.constant dense<0.000000e+00> : vector<112x56xf32>
    %4 = tpu.matmul %1, %3, %cst {dimension_numbers = #tpu.dot_dimension_numbers<[1], [0], [0], [1], [0, 0, 1, 1], [], []>} : vector<112x64xbf16>, vector<64x56xbf16>, vector<112x56xf32> -> vector<112x56xf32>
    %5 = vector.extract_strided_slice %0 {offsets = [8, 0], sizes = [112, 64], strides = [1, 1]} : vector<128x64xbf16> to vector<112x64xbf16>
    %c1 = arith.constant 1 : index
    %c0_4 = arith.constant 0 : index
    %c0_5 = arith.constant 0 : index
    %6 = vector.load %arg2[%c1, %c0_4, %c0_5] : memref<3x64x56xbf16, #tpu.memory_space<vmem>>, vector<1x64x56xbf16>
    %7 = vector.shape_cast %6 : vector<1x64x56xbf16> to vector<64x56xbf16>
    %cst_6 = arith.constant dense<0.000000e+00> : vector<112x56xf32>
    %8 = tpu.matmul %5, %7, %cst_6 {dimension_numbers = #tpu.dot_dimension_numbers<[1], [0], [0], [1], [0, 0, 1, 1], [], []>} : vector<112x64xbf16>, vector<64x56xbf16>, vector<112x56xf32> -> vector<112x56xf32>
    %9 = arith.addf %4, %8 : vector<112x56xf32>
    %10 = vector.extract_strided_slice %0 {offsets = [16, 0], sizes = [112, 64], strides = [1, 1]} : vector<128x64xbf16> to vector<112x64xbf16>
    %c2 = arith.constant 2 : index
    %c0_7 = arith.constant 0 : index
    %c0_8 = arith.constant 0 : index
    %11 = vector.load %arg2[%c2, %c0_7, %c0_8] : memref<3x64x56xbf16, #tpu.memory_space<vmem>>, vector<1x64x56xbf16>
    %12 = vector.shape_cast %11 : vector<1x64x56xbf16> to vector<64x56xbf16>
    %cst_9 = arith.constant dense<0.000000e+00> : vector<112x56xf32>
    %13 = tpu.matmul %10, %12, %cst_9 {dimension_numbers = #tpu.dot_dimension_numbers<[1], [0], [0], [1], [0, 0, 1, 1], [], []>} : vector<112x64xbf16>, vector<64x56xbf16>, vector<112x56xf32> -> vector<112x56xf32>
    %14 = arith.addf %9, %13 : vector<112x56xf32>
    %c0_10 = arith.constant 0 : index
    %c0_11 = arith.constant 0 : index
    %15 = vector.load %arg3[%c0_10, %c0_11] : memref<1x56xf32, #tpu.memory_space<vmem>>, vector<1x56xf32>
    %16 = vector.broadcast %15 : vector<1x56xf32> to vector<112x56xf32>
    %17 = arith.addf %14, %16 : vector<112x56xf32>
    %cst_12 = arith.constant 0.000000e+00 : f32
    %18 = vector.broadcast %cst_12 : f32 to vector<112x56xf32>
    %19 = arith.maximumf %17, %18 : vector<112x56xf32>
    %20 = arith.truncf %19 : vector<112x56xf32> to vector<112x56xbf16>
    %21 = vector.extract_strided_slice %20 {offsets = [0, 0], sizes = [96, 56], strides = [1, 1]} : vector<112x56xbf16> to vector<96x56xbf16>
    %c0_13 = arith.constant 0 : index
    %c0_14 = arith.constant 0 : index
    %c0_15 = arith.constant 0 : index
    %22 = vector.load %arg4[%c0_13, %c0_14, %c0_15] : memref<3x56x48xbf16, #tpu.memory_space<vmem>>, vector<1x56x48xbf16>
    %23 = vector.shape_cast %22 : vector<1x56x48xbf16> to vector<56x48xbf16>
    %cst_16 = arith.constant dense<0.000000e+00> : vector<96x48xf32>
    %24 = tpu.matmul %21, %23, %cst_16 {dimension_numbers = #tpu.dot_dimension_numbers<[1], [0], [0], [1], [0, 0, 1, 1], [], []>} : vector<96x56xbf16>, vector<56x48xbf16>, vector<96x48xf32> -> vector<96x48xf32>
    %25 = vector.extract_strided_slice %20 {offsets = [8, 0], sizes = [96, 56], strides = [1, 1]} : vector<112x56xbf16> to vector<96x56xbf16>
    %c1_17 = arith.constant 1 : index
    %c0_18 = arith.constant 0 : index
    %c0_19 = arith.constant 0 : index
    %26 = vector.load %arg4[%c1_17, %c0_18, %c0_19] : memref<3x56x48xbf16, #tpu.memory_space<vmem>>, vector<1x56x48xbf16>
    %27 = vector.shape_cast %26 : vector<1x56x48xbf16> to vector<56x48xbf16>
    %cst_20 = arith.constant dense<0.000000e+00> : vector<96x48xf32>
    %28 = tpu.matmul %25, %27, %cst_20 {dimension_numbers = #tpu.dot_dimension_numbers<[1], [0], [0], [1], [0, 0, 1, 1], [], []>} : vector<96x56xbf16>, vector<56x48xbf16>, vector<96x48xf32> -> vector<96x48xf32>
    %29 = arith.addf %24, %28 : vector<96x48xf32>
    %30 = vector.extract_strided_slice %20 {offsets = [16, 0], sizes = [96, 56], strides = [1, 1]} : vector<112x56xbf16> to vector<96x56xbf16>
    %c2_21 = arith.constant 2 : index
    %c0_22 = arith.constant 0 : index
    %c0_23 = arith.constant 0 : index
    %31 = vector.load %arg4[%c2_21, %c0_22, %c0_23] : memref<3x56x48xbf16, #tpu.memory_space<vmem>>, vector<1x56x48xbf16>
    %32 = vector.shape_cast %31 : vector<1x56x48xbf16> to vector<56x48xbf16>
    %cst_24 = arith.constant dense<0.000000e+00> : vector<96x48xf32>
    %33 = tpu.matmul %30, %32, %cst_24 {dimension_numbers = #tpu.dot_dimension_numbers<[1], [0], [0], [1], [0, 0, 1, 1], [], []>} : vector<96x56xbf16>, vector<56x48xbf16>, vector<96x48xf32> -> vector<96x48xf32>
    %34 = arith.addf %29, %33 : vector<96x48xf32>
    %c0_25 = arith.constant 0 : index
    %c0_26 = arith.constant 0 : index
    %35 = vector.load %arg5[%c0_25, %c0_26] : memref<1x48xf32, #tpu.memory_space<vmem>>, vector<1x48xf32>
    %36 = vector.broadcast %35 : vector<1x48xf32> to vector<96x48xf32>
    %37 = arith.addf %34, %36 : vector<96x48xf32>
    %cst_27 = arith.constant 0.000000e+00 : f32
    %38 = vector.broadcast %cst_27 : f32 to vector<96x48xf32>
    %39 = arith.maximumf %37, %38 : vector<96x48xf32>
    %40 = vector.shape_cast %39 : vector<96x48xf32> to vector<12x8x48xf32>
    %41 = arith.truncf %40 : vector<12x8x48xf32> to vector<12x8x48xbf16>
    %c0_28 = arith.constant 0 : index
    %c0_29 = arith.constant 0 : index
    %c0_30 = arith.constant 0 : index
    %42 = vector.load %arg6[%c0_28, %c0_29, %c0_30] : memref<12x48x120xbf16, #tpu.memory_space<vmem>>, vector<12x48x120xbf16>
    %cst_31 = arith.constant dense<0.000000e+00> : vector<12x8x120xf32>
    %43 = tpu.matmul %41, %42, %cst_31 {dimension_numbers = #tpu.dot_dimension_numbers<[2], [1], [1], [2], [0, 0, 0, 1, 1, 2], [0], [0]>} : vector<12x8x48xbf16>, vector<12x48x120xbf16>, vector<12x8x120xf32> -> vector<12x8x120xf32>
    %cst_32 = arith.constant dense<0.000000e+00> : vector<8x120xf32>
    %44 = vector.multi_reduction <add>, %43, %cst_32 [0] : vector<12x8x120xf32> to vector<8x120xf32>
    %c0_33 = arith.constant 0 : index
    %c0_34 = arith.constant 0 : index
    %45 = vector.load %arg7[%c0_33, %c0_34] : memref<1x120xf32, #tpu.memory_space<vmem>>, vector<1x120xf32>
    %46 = vector.broadcast %45 : vector<1x120xf32> to vector<8x120xf32>
    %47 = arith.addf %44, %46 : vector<8x120xf32>
    %cst_35 = arith.constant 0.000000e+00 : f32
    %48 = vector.broadcast %cst_35 : f32 to vector<8x120xf32>
    %49 = arith.maximumf %47, %48 : vector<8x120xf32>
    %50 = arith.truncf %49 : vector<8x120xf32> to vector<8x120xbf16>
    %c0_36 = arith.constant 0 : index
    %c0_37 = arith.constant 0 : index
    %51 = vector.load %arg8[%c0_36, %c0_37] : memref<120x84xbf16, #tpu.memory_space<vmem>>, vector<120x84xbf16>
    %cst_38 = arith.constant dense<0.000000e+00> : vector<8x84xf32>
    %52 = tpu.matmul %50, %51, %cst_38 {dimension_numbers = #tpu.dot_dimension_numbers<[1], [0], [0], [1], [0, 0, 1, 1], [], []>} : vector<8x120xbf16>, vector<120x84xbf16>, vector<8x84xf32> -> vector<8x84xf32>
    %c0_39 = arith.constant 0 : index
    %c0_40 = arith.constant 0 : index
    %53 = vector.load %arg9[%c0_39, %c0_40] : memref<1x84xf32, #tpu.memory_space<vmem>>, vector<1x84xf32>
    %54 = vector.broadcast %53 : vector<1x84xf32> to vector<8x84xf32>
    %55 = arith.addf %52, %54 : vector<8x84xf32>
    %cst_41 = arith.constant 0.000000e+00 : f32
    %56 = vector.broadcast %cst_41 : f32 to vector<8x84xf32>
    %57 = arith.maximumf %55, %56 : vector<8x84xf32>
    %58 = arith.truncf %57 : vector<8x84xf32> to vector<8x84xbf16>
    %c0_42 = arith.constant 0 : index
    %c0_43 = arith.constant 0 : index
    %59 = vector.load %arg10[%c0_42, %c0_43] : memref<84x6xbf16, #tpu.memory_space<vmem>>, vector<84x6xbf16>
    %cst_44 = arith.constant dense<0.000000e+00> : vector<8x6xf32>
    %60 = tpu.matmul %58, %59, %cst_44 {dimension_numbers = #tpu.dot_dimension_numbers<[1], [0], [0], [1], [0, 0, 1, 1], [], []>} : vector<8x84xbf16>, vector<84x6xbf16>, vector<8x6xf32> -> vector<8x6xf32>
    %c0_45 = arith.constant 0 : index
    %c0_46 = arith.constant 0 : index
    %61 = vector.load %arg11[%c0_45, %c0_46] : memref<1x6xf32, #tpu.memory_space<vmem>>, vector<1x6xf32>
    %62 = vector.broadcast %61 : vector<1x6xf32> to vector<8x6xf32>
    %63 = arith.addf %60, %62 : vector<8x6xf32>
    %c0_47 = arith.constant 0 : index
    %c0_48 = arith.constant 0 : index
    %64 = vector.load %arg12[%c0_47, %c0_48] : memref<8x6xf32, #tpu.memory_space<vmem>>, vector<8x6xf32>
    tpu.vector_store %arg12[%c0_47, %c0_48], %63 {strides = array<i32>} : memref<8x6xf32, #tpu.memory_space<vmem>>, vector<8x6xf32>,
    return
  }
  func.func @transform_0(%arg0: i32) -> (i32, i32) {
    %c0_i32 = arith.constant 0 : i32
    %c0_i32_0 = arith.constant 0 : i32
    return %arg0, %c0_i32 : i32, i32
  }
  func.func @transform_1(%arg0: i32) -> (i32, i32, i32) {
    %c0_i32 = arith.constant 0 : i32
    %c0_i32_0 = arith.constant 0 : i32
    %c0_i32_1 = arith.constant 0 : i32
    %c0_i32_2 = arith.constant 0 : i32
    return %c0_i32, %c0_i32_0, %c0_i32_1 : i32, i32, i32
  }
  func.func @transform_2(%arg0: i32) -> (i32, i32) {
    %c0_i32 = arith.constant 0 : i32
    %c0_i32_0 = arith.constant 0 : i32
    %c0_i32_1 = arith.constant 0 : i32
    return %c0_i32, %c0_i32_0 : i32, i32
  }
  func.func @transform_3(%arg0: i32) -> (i32, i32, i32) {
    %c0_i32 = arith.constant 0 : i32
    %c0_i32_0 = arith.constant 0 : i32
    %c0_i32_1 = arith.constant 0 : i32
    %c0_i32_2 = arith.constant 0 : i32
    return %c0_i32, %c0_i32_0, %c0_i32_1 : i32, i32, i32
  }
  func.func @transform_4(%arg0: i32) -> (i32, i32) {
    %c0_i32 = arith.constant 0 : i32
    %c0_i32_0 = arith.constant 0 : i32
    %c0_i32_1 = arith.constant 0 : i32
    return %c0_i32, %c0_i32_0 : i32, i32
  }
  func.func @transform_5(%arg0: i32) -> (i32, i32, i32) {
    %c0_i32 = arith.constant 0 : i32
    %c0_i32_0 = arith.constant 0 : i32
    %c0_i32_1 = arith.constant 0 : i32
    %c0_i32_2 = arith.constant 0 : i32
    return %c0_i32, %c0_i32_0, %c0_i32_1 : i32, i32, i32
  }
  func.func @transform_6(%arg0: i32) -> (i32, i32) {
    %c0_i32 = arith.constant 0 : i32
    %c0_i32_0 = arith.constant 0 : i32
    %c0_i32_1 = arith.constant 0 : i32
    return %c0_i32, %c0_i32_0 : i32, i32
  }
  func.func @transform_7(%arg0: i32) -> (i32, i32) {
    %c0_i32 = arith.constant 0 : i32
    %c0_i32_0 = arith.constant 0 : i32
    %c0_i32_1 = arith.constant 0 : i32
    return %c0_i32, %c0_i32_0 : i32, i32
  }
  func.func @transform_8(%arg0: i32) -> (i32, i32) {
    %c0_i32 = arith.constant 0 : i32
    %c0_i32_0 = arith.constant 0 : i32
    %c0_i32_1 = arith.constant 0 : i32
    return %c0_i32, %c0_i32_0 : i32, i32
  }
  func.func @transform_9(%arg0: i32) -> (i32, i32) {
    %c0_i32 = arith.constant 0 : i32
    %c0_i32_0 = arith.constant 0 : i32
    %c0_i32_1 = arith.constant 0 : i32
    return %c0_i32, %c0_i32_0 : i32, i32
  }
  func.func @transform_10(%arg0: i32) -> (i32, i32) {
    %c0_i32 = arith.constant 0 : i32
    %c0_i32_0 = arith.constant 0 : i32
    %c0_i32_1 = arith.constant 0 : i32
    return %c0_i32, %c0_i32_0 : i32, i32
  }
  func.func @transform_11(%arg0: i32) -> (i32, i32) {
    %c0_i32 = arith.constant 0 : i32
    %c0_i32_0 = arith.constant 0 : i32
    return %arg0, %c0_i32 : i32, i32
  }
}

</mosaic_0001>

<llo_original>
// kernel: qnetwork_forward.1
$region0: #{qnetwork_forward.1}
  #allocation0 [shape = 'u32[]', space=smem, size = 0x4, offset = 0x4, fixed_abs, tag = 'smem constant byte address 0x4 - core index']
  #allocation1 [shape = 'u32[144,128]{1,0:T(1,128)}', space=vmem, size = 0x12000, scoped, tag = 'internal scratch']
  %s0 = inlined_call_operand.vmem [shape: bf16[128,64], index: 0, kind: input, shape index: {}]
  %s1 = inlined_call_operand.vmem [shape: bf16[3,64,56], index: 1, kind: input, shape index: {}]
  %s2 = inlined_call_operand.vmem [shape: f32[1,56], index: 2, kind: input, shape index: {}]
  %s3 = inlined_call_operand.vmem [shape: bf16[3,56,48], index: 3, kind: input, shape index: {}]
  %s4 = inlined_call_operand.vmem [shape: f32[1,48], index: 4, kind: input, shape index: {}]
  %s5 = inlined_call_operand.vmem [shape: bf16[12,48,120], index: 5, kind: input, shape index: {}]
  %s6 = inlined_call_operand.vmem [shape: f32[1,120], index: 6, kind: input, shape index: {}]
  %s7 = inlined_call_operand.vmem [shape: bf16[120,84], index: 7, kind: input, shape index: {}]
  %s8 = inlined_call_operand.vmem [shape: f32[1,84], index: 8, kind: input, shape index: {}]
  %s9 = inlined_call_operand.vmem [shape: bf16[84,6], index: 9, kind: input, shape index: {}]
  %s10 = inlined_call_operand.vmem [shape: f32[1,6], index: 10, kind: input, shape index: {}]
  %s11 = inlined_call_operand.vmem [shape: f32[8,6], index: 11, kind: output, shape index: {}]
  %s12 = sld [smem:[#allocation0]]
  $region54: #{qnetwork_forward.1} parent=0
    _
  %s14 = ssub.s32 1, %s12
  %s15 = scalar_select 0, %s14, %s12
  // Predicated region
  $region2: #{qnetwork_forward.1} parent=0 // pred_check
    _
  $region3: #{qnetwork_forward.1} parent=0 // pred_check_branch
    %17 = sbr.rel (0) target = $region5
  $region4: #{qnetwork_forward.1} parent=0 // pred_region
    _
  $region5: #{qnetwork_forward.1} parent=0 // pred_fallthru
    _
  // Predicated region
  $region6: #{qnetwork_forward.1} parent=0 // pred_check
    _
  $region7: #{qnetwork_forward.1} parent=0 // pred_check_branch
    %19 = sbr.rel (0) target = $region9
  $region8: #{qnetwork_forward.1} parent=0 // pred_region
    _
  $region9: #{qnetwork_forward.1} parent=0 // pred_fallthru
    _
  // Predicated region
  $region10: #{qnetwork_forward.1} parent=0 // pred_check
    _
  $region11: #{qnetwork_forward.1} parent=0 // pred_check_branch
    %21 = sbr.rel (0) target = $region13
  $region12: #{qnetwork_forward.1} parent=0 // pred_region
    _
  $region13: #{qnetwork_forward.1} parent=0 // pred_fallthru
    _
  // Predicated region
  $region14: #{qnetwork_forward.1} parent=0 // pred_check
    _
  $region15: #{qnetwork_forward.1} parent=0 // pred_check_branch
    %23 = sbr.rel (0) target = $region17
  $region16: #{qnetwork_forward.1} parent=0 // pred_region
    _
  $region17: #{qnetwork_forward.1} parent=0 // pred_fallthru
    _
  // Predicated region
  $region18: #{qnetwork_forward.1} parent=0 // pred_check
    _
  $region19: #{qnetwork_forward.1} parent=0 // pred_check_branch
    %25 = sbr.rel (0) target = $region21
  $region20: #{qnetwork_forward.1} parent=0 // pred_region
    _
  $region21: #{qnetwork_forward.1} parent=0 // pred_fallthru
    _
  // Predicated region
  $region22: #{qnetwork_forward.1} parent=0 // pred_check
    _
  $region23: #{qnetwork_forward.1} parent=0 // pred_check_branch
    %27 = sbr.rel (0) target = $region25
  $region24: #{qnetwork_forward.1} parent=0 // pred_region
    _
  $region25: #{qnetwork_forward.1} parent=0 // pred_fallthru
    _
  // Predicated region
  $region26: #{qnetwork_forward.1} parent=0 // pred_check
    _
  $region27: #{qnetwork_forward.1} parent=0 // pred_check_branch
    %29 = sbr.rel (0) target = $region29
  $region28: #{qnetwork_forward.1} parent=0 // pred_region
    _
  $region29: #{qnetwork_forward.1} parent=0 // pred_fallthru
    _
  // Predicated region
  $region30: #{qnetwork_forward.1} parent=0 // pred_check
    _
  $region31: #{qnetwork_forward.1} parent=0 // pred_check_branch
    %31 = sbr.rel (0) target = $region33
  $region32: #{qnetwork_forward.1} parent=0 // pred_region
    _
  $region33: #{qnetwork_forward.1} parent=0 // pred_fallthru
    _
  // Predicated region
  $region34: #{qnetwork_forward.1} parent=0 // pred_check
    _
  $region35: #{qnetwork_forward.1} parent=0 // pred_check_branch
    %33 = sbr.rel (0) target = $region37
  $region36: #{qnetwork_forward.1} parent=0 // pred_region
    _
  $region37: #{qnetwork_forward.1} parent=0 // pred_fallthru
    _
  // Predicated region
  $region38: #{qnetwork_forward.1} parent=0 // pred_check
    _
  $region39: #{qnetwork_forward.1} parent=0 // pred_check_branch
    %35 = sbr.rel (0) target = $region41
  $region40: #{qnetwork_forward.1} parent=0 // pred_region
    _
  $region41: #{qnetwork_forward.1} parent=0 // pred_fallthru
    _
  // Predicated region
  $region42: #{qnetwork_forward.1} parent=0 // pred_check
    _
  $region43: #{qnetwork_forward.1} parent=0 // pred_check_branch
    %37 = sbr.rel (0) target = $region45
  $region44: #{qnetwork_forward.1} parent=0 // pred_region
    _
  $region45: #{qnetwork_forward.1} parent=0 // pred_fallthru
    _
  %v39 = vld [vmem:[%s0] sm:$0xf]
  %v40 = vld [vmem:[%s0 + $0x4] sm:$0xf]
  %v41 = vld [vmem:[%s0 + $0x8] sm:$0xf]
  %v42 = vld [vmem:[%s0 + $0xc] sm:$0xf]
  %v43 = vld [vmem:[%s0 + $0x10] sm:$0xf]
  %v44 = vld [vmem:[%s0 + $0x14] sm:$0xf]
  %v45 = vld [vmem:[%s0 + $0x18] sm:$0xf]
  %v46 = vld [vmem:[%s0 + $0x1c] sm:$0xf]
  %v47 = vld [vmem:[%s0 + $0x20] sm:$0xf]
  %v48 = vld [vmem:[%s0 + $0x24] sm:$0xf]
  %v49 = vld [vmem:[%s0 + $0x28] sm:$0xf]
  %v50 = vld [vmem:[%s0 + $0x2c] sm:$0xf]
  %v51 = vld [vmem:[%s0 + $0x30] sm:$0xf]
  %v52 = vld [vmem:[%s0 + $0x34] sm:$0xf]
  %v53 = vld [vmem:[%s0 + $0x38] sm:$0xf]
  %v54 = vld [vmem:[%s0 + $0x3c] sm:$0xf]
  %v55 = vld [vmem:[%s1] sm:$0xf]
  %v56 = vld [vmem:[%s1 + $0x4] sm:$0xf]
  %v57 = vld [vmem:[%s1 + $0x8] sm:$0xf]
  %v58 = vld [vmem:[%s1 + $0xc] sm:$0xf]
  %v59 = vld [vmem:[%s1 + $0x10] sm:$0xf]
  %v60 = vld [vmem:[%s1 + $0x14] sm:$0xf]
  %v61 = vld [vmem:[%s1 + $0x18] sm:$0xf]
  %v62 = vld [vmem:[%s1 + $0x1c] sm:$0xf]
  %s63 = scalar_lea.vmem %s1, 32
  %v64 = vld [vmem:[%s63] sm:$0xf]
  %v65 = vld [vmem:[%s63 + $0x4] sm:$0xf]
  %v66 = vld [vmem:[%s63 + $0x8] sm:$0xf]
  %v67 = vld [vmem:[%s63 + $0xc] sm:$0xf]
  %v68 = vld [vmem:[%s63 + $0x10] sm:$0xf]
  %v69 = vld [vmem:[%s63 + $0x14] sm:$0xf]
  %v70 = vld [vmem:[%s63 + $0x18] sm:$0xf]
  %v71 = vld [vmem:[%s63 + $0x1c] sm:$0xf]
  %v86 = vunpack.c.l.b16 %v40
  %v87 = vunpack.c.l.b16 %v41
  %v88 = vunpack.c.l.b16 %v42
  %v89 = vunpack.c.l.b16 %v43
  %v90 = vunpack.c.l.b16 %v44
  %v91 = vunpack.c.l.b16 %v45
  %v92 = vunpack.c.l.b16 %v46
  %v93 = vunpack.c.l.b16 %v47
  %v94 = vunpack.c.l.b16 %v48
  %v95 = vunpack.c.l.b16 %v49
  %v96 = vunpack.c.l.b16 %v50
  %v97 = vunpack.c.l.b16 %v51
  %v98 = vunpack.c.l.b16 %v52
  %v99 = vunpack.c.l.b16 %v53
  %v100 = vpack.c.b16 %v87, %v86
  %v101 = vpack.c.b16 %v89, %v88
  %v102 = vpack.c.b16 %v91, %v90
  %v103 = vpack.c.b16 %v93, %v92
  %v104 = vpack.c.b16 %v95, %v94
  %v105 = vpack.c.b16 %v97, %v96
  %v106 = vpack.c.b16 %v99, %v98
  %v115 = vunpack.c.l.b16 %v64
  %v116 = vunpack.c.l.b16 %v65
  %v117 = vunpack.c.l.b16 %v66
  %v118 = vunpack.c.l.b16 %v67
  %v119 = vunpack.c.l.b16 %v68
  %v120 = vunpack.c.l.b16 %v69
  %v121 = vunpack.c.l.b16 %v70
  %v122 = vunpack.c.l.b16 %v71
  %v123 = vpack.c.b16 %v116, %v115
  %v124 = vpack.c.b16 %v118, %v117
  %v125 = vpack.c.b16 %v120, %v119
  %v126 = vpack.c.b16 %v122, %v121
  %vm131 = vcmask 523264
  %v133 = vsel %vm131, %v100, 0
  %v136 = vsel %vm131, %v101, 0
  %v139 = vsel %vm131, %v102, 0
  %v142 = vsel %vm131, %v103, 0
  %v145 = vsel %vm131, %v104, 0
  %v148 = vsel %vm131, %v105, 0
  %v151 = vsel %vm131, %v106, 0
  %153 = vmatprep.subr.bf16.mxu0 0
  %154 = vmatpush1.bf16.msra.mxu0 %v123
  %155 = vmatprep.subr.bf16.mxu0 0
  %156 = vmatpush1.bf16.msra.mxu0 %v124
  %157 = vmatprep.subr.bf16.mxu0 0
  %158 = vmatpush1.bf16.msra.mxu0 %v125
  %159 = vmatprep.subr.bf16.mxu0 0
  %160 = vmatpush1.bf16.msra.mxu0 %v126
  %161 = vmatprep.subr.bf16.mxu0 0
  %162 = vmatpush1.bf16.msra.mxu0 0
  %163 = vmatprep.subr.bf16.mxu0 0
  %164 = vmatpush1.bf16.msra.mxu0 0
  %165 = vmatprep.subr.bf16.mxu0 0
  %166 = vmatpush1.bf16.msra.mxu0 0
  %167 = vmatprep.subr.bf16.mxu0 0
  %168 = vmatpush1.bf16.msra.mxu0 0
  %169 = vmatprep.subr.bf16.mxu0 0
  %170 = vmatpush1.bf16.msra.mxu0 0
  %171 = vmatprep.subr.bf16.mxu0 0
  %172 = vmatpush1.bf16.msra.mxu0 0
  %173 = vmatprep.subr.bf16.mxu0 0
  %174 = vmatpush1.bf16.msra.mxu0 0
  %175 = vmatprep.subr.bf16.mxu0 0
  %176 = vmatpush1.bf16.msra.mxu0 0
  %177 = vmatprep.subr.bf16.mxu0 0
  %178 = vmatpush1.bf16.msra.mxu0 0
  %179 = vmatprep.subr.bf16.mxu0 0
  %180 = vmatpush1.bf16.msra.mxu0 0
  %181 = vmatprep.subr.bf16.mxu0 0
  %182 = vmatpush1.bf16.msra.mxu0 0
  %183 = vmatprep.subr.bf16.mxu0 0
  %184 = vmatpush1.bf16.msra.mxu0 0
  %185 = vmatprep.mubr.bf16.mxu0 0
  %186 = vmatmul.mubr.bf16.gmra.mrb[0].mxu0 %v133
  %v187 = vpop.f32.mrb[0].mxu0
  %v188 = vadd.f32 0.0, %v187
  %v189 = vpop.f32.mrb[0].mxu0
  %v190 = vpop.f32.mrb[0].mxu0
  %v191 = vadd.f32 0.0, %v190
  %v192 = vpop.f32.mrb[0].mxu0
  %193 = vmatprep.mubr.bf16.mxu0 0
  %194 = vmatmul.mubr.bf16.gmra.mrb[0].mxu0 %v136
  %v195 = vpop.f32.mrb[0].mxu0
  %v196 = vadd.f32 0.0, %v195
  %v197 = vpop.f32.mrb[0].mxu0
  %v198 = vpop.f32.mrb[0].mxu0
  %v199 = vadd.f32 0.0, %v198
  %v200 = vpop.f32.mrb[0].mxu0
  %201 = vmatprep.mubr.bf16.mxu0 0
  %202 = vmatmul.mubr.bf16.gmra.mrb[0].mxu0 %v139
  %v203 = vpop.f32.mrb[0].mxu0
  %v204 = vadd.f32 0.0, %v203
  %v205 = vpop.f32.mrb[0].mxu0
  %v206 = vpop.f32.mrb[0].mxu0
  %v207 = vadd.f32 0.0, %v206
  %v208 = vpop.f32.mrb[0].mxu0
  %209 = vmatprep.mubr.bf16.mxu0 0
  %210 = vmatmul.mubr.bf16.gmra.mrb[0].mxu0 %v142
  %v211 = vpop.f32.mrb[0].mxu0
  %v212 = vadd.f32 0.0, %v211
  %v213 = vpop.f32.mrb[0].mxu0
  %v214 = vpop.f32.mrb[0].mxu0
  %v215 = vadd.f32 0.0, %v214
  %v216 = vpop.f32.mrb[0].mxu0
  %217 = vmatprep.mubr.bf16.mxu0 0
  %218 = vmatmul.mubr.bf16.gmra.mrb[0].mxu0 %v145
  %v219 = vpop.f32.mrb[0].mxu0
  %v220 = vadd.f32 0.0, %v219
  %v221 = vpop.f32.mrb[0].mxu0
  %v222 = vpop.f32.mrb[0].mxu0
  %v223 = vadd.f32 0.0, %v222
  %v224 = vpop.f32.mrb[0].mxu0
  %225 = vmatprep.mubr.bf16.mxu0 0
  %226 = vmatmul.mubr.bf16.gmra.mrb[0].mxu0 %v148
  %v227 = vpop.f32.mrb[0].mxu0
  %v228 = vadd.f32 0.0, %v227
  %v229 = vpop.f32.mrb[0].mxu0
  %v230 = vpop.f32.mrb[0].mxu0
  %v231 = vadd.f32 0.0, %v230
  %v232 = vpop.f32.mrb[0].mxu0
  %233 = vmatprep.mubr.bf16.mxu0 0
  %234 = vmatmul.mubr.bf16.gmra.mrb[0].mxu0 %v151
  %v235 = vpop.f32.mrb[0].mxu0
  %v236 = vadd.f32 0.0, %v235
  %v237 = vpop.f32.mrb[0].mxu0
  %v238 = vpop.f32.mrb[0].mxu0
  %v239 = vadd.f32 0.0, %v238
  %v240 = vpop.f32.mrb[0].mxu0
  %241 = vdwg.mxu0
  %v243 = vunpack.c.l.b16 %v39
  %v244 = vpack.c.b16 %v86, %v243
  %v245 = vpack.c.b16 %v88, %v87
  %v246 = vpack.c.b16 %v90, %v89
  %v247 = vpack.c.b16 %v92, %v91
  %v248 = vpack.c.b16 %v94, %v93
  %v249 = vpack.c.b16 %v96, %v95
  %v250 = vpack.c.b16 %v98, %v97
  %v259 = vunpack.c.l.b16 %v55
  %v260 = vunpack.c.l.b16 %v56
  %v261 = vunpack.c.l.b16 %v57
  %v262 = vunpack.c.l.b16 %v58
  %v263 = vunpack.c.l.b16 %v59
  %v264 = vunpack.c.l.b16 %v60
  %v265 = vunpack.c.l.b16 %v61
  %v266 = vunpack.c.l.b16 %v62
  %v267 = vpack.c.b16 %v260, %v259
  %v268 = vpack.c.b16 %v262, %v261
  %v269 = vpack.c.b16 %v264, %v263
  %v270 = vpack.c.b16 %v266, %v265
  %v276 = vsel %vm131, %v244, 0
  %v279 = vsel %vm131, %v245, 0
  %v282 = vsel %vm131, %v246, 0
  %v285 = vsel %vm131, %v247, 0
  %v288 = vsel %vm131, %v248, 0
  %v291 = vsel %vm131, %v249, 0
  %v294 = vsel %vm131, %v250, 0
  %296 = vmatprep.subr.bf16.mxu0 0
  %297 = vmatpush1.bf16.msra.mxu0 %v267
  %298 = vmatprep.subr.bf16.mxu0 0
  %299 = vmatpush1.bf16.msra.mxu0 %v268
  %300 = vmatprep.subr.bf16.mxu0 0
  %301 = vmatpush1.bf16.msra.mxu0 %v269
  %302 = vmatprep.subr.bf16.mxu0 0
  %303 = vmatpush1.bf16.msra.mxu0 %v270
  %304 = vmatprep.subr.bf16.mxu0 0
  %305 = vmatpush1.bf16.msra.mxu0 0
  %306 = vmatprep.subr.bf16.mxu0 0
  %307 = vmatpush1.bf16.msra.mxu0 0
  %308 = vmatprep.subr.bf16.mxu0 0
  %309 = vmatpush1.bf16.msra.mxu0 0
  %310 = vmatprep.subr.bf16.mxu0 0
  %311 = vmatpush1.bf16.msra.mxu0 0
  %312 = vmatprep.subr.bf16.mxu0 0
  %313 = vmatpush1.bf16.msra.mxu0 0
  %314 = vmatprep.subr.bf16.mxu0 0
  %315 = vmatpush1.bf16.msra.mxu0 0
  %316 = vmatprep.subr.bf16.mxu0 0
  %317 = vmatpush1.bf16.msra.mxu0 0
  %318 = vmatprep.subr.bf16.mxu0 0
  %319 = vmatpush1.bf16.msra.mxu0 0
  %320 = vmatprep.subr.bf16.mxu0 0
  %321 = vmatpush1.bf16.msra.mxu0 0
  %322 = vmatprep.subr.bf16.mxu0 0
  %323 = vmatpush1.bf16.msra.mxu0 0
  %324 = vmatprep.subr.bf16.mxu0 0
  %325 = vmatpush1.bf16.msra.mxu0 0
  %326 = vmatprep.subr.bf16.mxu0 0
  %327 = vmatpush1.bf16.msra.mxu0 0
  %328 = vmatprep.mubr.bf16.mxu0 0
  %329 = vmatmul.mubr.bf16.gmra.mrb[0].mxu0 %v276
  %v330 = vpop.f32.mrb[0].mxu0
  %v331 = vadd.f32 %v188, %v330
  %v332 = vpop.f32.mrb[0].mxu0
  %v333 = vpop.f32.mrb[0].mxu0
  %v334 = vadd.f32 %v191, %v333
  %v335 = vpop.f32.mrb[0].mxu0
  %336 = vmatprep.mubr.bf16.mxu0 0
  %337 = vmatmul.mubr.bf16.gmra.mrb[0].mxu0 %v279
  %v338 = vpop.f32.mrb[0].mxu0
  %v339 = vadd.f32 %v196, %v338
  %v340 = vpop.f32.mrb[0].mxu0
  %v341 = vpop.f32.mrb[0].mxu0
  %v342 = vadd.f32 %v199, %v341
  %v343 = vpop.f32.mrb[0].mxu0
  %344 = vmatprep.mubr.bf16.mxu0 0
  %345 = vmatmul.mubr.bf16.gmra.mrb[0].mxu0 %v282
  %v346 = vpop.f32.mrb[0].mxu0
  %v347 = vadd.f32 %v204, %v346
  %v348 = vpop.f32.mrb[0].mxu0
  %v349 = vpop.f32.mrb[0].mxu0
  %v350 = vadd.f32 %v207, %v349
  %v351 = vpop.f32.mrb[0].mxu0
  %352 = vmatprep.mubr.bf16.mxu0 0
  %353 = vmatmul.mubr.bf16.gmra.mrb[0].mxu0 %v285
  %v354 = vpop.f32.mrb[0].mxu0
  %v355 = vadd.f32 %v212, %v354
  %v356 = vpop.f32.mrb[0].mxu0
  %v357 = vpop.f32.mrb[0].mxu0
  %v358 = vadd.f32 %v215, %v357
  %v359 = vpop.f32.mrb[0].mxu0
  %360 = vmatprep.mubr.bf16.mxu0 0
  %361 = vmatmul.mubr.bf16.gmra.mrb[0].mxu0 %v288
  %v362 = vpop.f32.mrb[0].mxu0
  %v363 = vadd.f32 %v220, %v362
  %v364 = vpop.f32.mrb[0].mxu0
  %v365 = vpop.f32.mrb[0].mxu0
  %v366 = vadd.f32 %v223, %v365
  %v367 = vpop.f32.mrb[0].mxu0
  %368 = vmatprep.mubr.bf16.mxu0 0
  %369 = vmatmul.mubr.bf16.gmra.mrb[0].mxu0 %v291
  %v370 = vpop.f32.mrb[0].mxu0
  %v371 = vadd.f32 %v228, %v370
  %v372 = vpop.f32.mrb[0].mxu0
  %v373 = vpop.f32.mrb[0].mxu0
  %v374 = vadd.f32 %v231, %v373
  %v375 = vpop.f32.mrb[0].mxu0
  %376 = vmatprep.mubr.bf16.mxu0 0
  %377 = vmatmul.mubr.bf16.gmra.mrb[0].mxu0 %v294
  %v378 = vpop.f32.mrb[0].mxu0
  %v379 = vadd.f32 %v236, %v378
  %v380 = vpop.f32.mrb[0].mxu0
  %v381 = vpop.f32.mrb[0].mxu0
  %v382 = vadd.f32 %v239, %v381
  %v383 = vpop.f32.mrb[0].mxu0
  %384 = vdwg.mxu0
  %s385 = scalar_lea.vmem %s1, 64
  %v386 = vld [vmem:[%s385] sm:$0xf]
  %v387 = vld [vmem:[%s385 + $0x4] sm:$0xf]
  %v388 = vld [vmem:[%s385 + $0x8] sm:$0xf]
  %v389 = vld [vmem:[%s385 + $0xc] sm:$0xf]
  %v390 = vld [vmem:[%s385 + $0x10] sm:$0xf]
  %v391 = vld [vmem:[%s385 + $0x14] sm:$0xf]
  %v392 = vld [vmem:[%s385 + $0x18] sm:$0xf]
  %v393 = vld [vmem:[%s385 + $0x1c] sm:$0xf]
  %v395 = vunpack.c.l.b16 %v54
  %v396 = vpack.c.b16 %v395, %v99
  %v405 = vunpack.c.l.b16 %v386
  %v406 = vunpack.c.l.b16 %v387
  %v407 = vunpack.c.l.b16 %v388
  %v408 = vunpack.c.l.b16 %v389
  %v409 = vunpack.c.l.b16 %v390
  %v410 = vunpack.c.l.b16 %v391
  %v411 = vunpack.c.l.b16 %v392
  %v412 = vunpack.c.l.b16 %v393
  %v413 = vpack.c.b16 %v406, %v405
  %v414 = vpack.c.b16 %v408, %v407
  %v415 = vpack.c.b16 %v410, %v409
  %v416 = vpack.c.b16 %v412, %v411
  %v422 = vsel %vm131, %v396, 0
  %424 = vmatprep.subr.bf16.mxu0 0
  %425 = vmatpush1.bf16.msra.mxu0 %v413
  %426 = vmatprep.subr.bf16.mxu0 0
  %427 = vmatpush1.bf16.msra.mxu0 %v414
  %428 = vmatprep.subr.bf16.mxu0 0
  %429 = vmatpush1.bf16.msra.mxu0 %v415
  %430 = vmatprep.subr.bf16.mxu0 0
  %431 = vmatpush1.bf16.msra.mxu0 %v416
  %432 = vmatprep.subr.bf16.mxu0 0
  %433 = vmatpush1.bf16.msra.mxu0 0
  %434 = vmatprep.subr.bf16.mxu0 0
  %435 = vmatpush1.bf16.msra.mxu0 0
  %436 = vmatprep.subr.bf16.mxu0 0
  %437 = vmatpush1.bf16.msra.mxu0 0
  %438 = vmatprep.subr.bf16.mxu0 0
  %439 = vmatpush1.bf16.msra.mxu0 0
  %440 = vmatprep.subr.bf16.mxu0 0
  %441 = vmatpush1.bf16.msra.mxu0 0
  %442 = vmatprep.subr.bf16.mxu0 0
  %443 = vmatpush1.bf16.msra.mxu0 0
  %444 = vmatprep.subr.bf16.mxu0 0
  %445 = vmatpush1.bf16.msra.mxu0 0
  %446 = vmatprep.subr.bf16.mxu0 0
  %447 = vmatpush1.bf16.msra.mxu0 0
  %448 = vmatprep.subr.bf16.mxu0 0
  %449 = vmatpush1.bf16.msra.mxu0 0
  %450 = vmatprep.subr.bf16.mxu0 0
  %451 = vmatpush1.bf16.msra.mxu0 0
  %452 = vmatprep.subr.bf16.mxu0 0
  %453 = vmatpush1.bf16.msra.mxu0 0
  %454 = vmatprep.subr.bf16.mxu0 0
  %455 = vmatpush1.bf16.msra.mxu0 0
  %456 = vmatprep.mubr.bf16.mxu0 0
  %457 = vmatmul.mubr.bf16.gmra.mrb[0].mxu0 %v279
  %v458 = vpop.f32.mrb[0].mxu0
  %v459 = vadd.f32 0.0, %v458
  %v460 = vpop.f32.mrb[0].mxu0
  %v461 = vpop.f32.mrb[0].mxu0
  %v462 = vadd.f32 0.0, %v461
  %v463 = vpop.f32.mrb[0].mxu0
  %464 = vmatprep.mubr.bf16.mxu0 0
  %465 = vmatmul.mubr.bf16.gmra.mrb[0].mxu0 %v282
  %v466 = vpop.f32.mrb[0].mxu0
  %v467 = vadd.f32 0.0, %v466
  %v468 = vpop.f32.mrb[0].mxu0
  %v469 = vpop.f32.mrb[0].mxu0
  %v470 = vadd.f32 0.0, %v469
  %v471 = vpop.f32.mrb[0].mxu0
  %472 = vmatprep.mubr.bf16.mxu0 0
  %473 = vmatmul.mubr.bf16.gmra.mrb[0].mxu0 %v285
  %v474 = vpop.f32.mrb[0].mxu0
  %v475 = vadd.f32 0.0, %v474
  %v476 = vpop.f32.mrb[0].mxu0
  %v477 = vpop.f32.mrb[0].mxu0
  %v478 = vadd.f32 0.0, %v477
  %v479 = vpop.f32.mrb[0].mxu0
  %480 = vmatprep.mubr.bf16.mxu0 0
  %481 = vmatmul.mubr.bf16.gmra.mrb[0].mxu0 %v288
  %v482 = vpop.f32.mrb[0].mxu0
  %v483 = vadd.f32 0.0, %v482
  %v484 = vpop.f32.mrb[0].mxu0
  %v485 = vpop.f32.mrb[0].mxu0
  %v486 = vadd.f32 0.0, %v485
  %v487 = vpop.f32.mrb[0].mxu0
  %488 = vmatprep.mubr.bf16.mxu0 0
  %489 = vmatmul.mubr.bf16.gmra.mrb[0].mxu0 %v291
  %v490 = vpop.f32.mrb[0].mxu0
  %v491 = vadd.f32 0.0, %v490
  %v492 = vpop.f32.mrb[0].mxu0
  %v493 = vpop.f32.mrb[0].mxu0
  %v494 = vadd.f32 0.0, %v493
  %v495 = vpop.f32.mrb[0].mxu0
  %496 = vmatprep.mubr.bf16.mxu0 0
  %497 = vmatmul.mubr.bf16.gmra.mrb[0].mxu0 %v294
  %v498 = vpop.f32.mrb[0].mxu0
  %v499 = vadd.f32 0.0, %v498
  %v500 = vpop.f32.mrb[0].mxu0
  %v501 = vpop.f32.mrb[0].mxu0
  %v502 = vadd.f32 0.0, %v501
  %v503 = vpop.f32.mrb[0].mxu0
  %504 = vmatprep.mubr.bf16.mxu0 0
  %505 = vmatmul.mubr.bf16.gmra.mrb[0].mxu0 %v422
  %v506 = vpop.f32.mrb[0].mxu0
  %v507 = vadd.f32 0.0, %v506
  %v508 = vpop.f32.mrb[0].mxu0
  %v509 = vpop.f32.mrb[0].mxu0
  %v510 = vadd.f32 0.0, %v509
  %v511 = vpop.f32.mrb[0].mxu0
  %512 = vdwg.mxu0
  %v513 = vadd.f32 %v331, %v459
  %v514 = vadd.f32 %v334, %v462
  %v515 = vadd.f32 %v339, %v467
  %v516 = vadd.f32 %v342, %v470
  %v517 = vadd.f32 %v347, %v475
  %v518 = vadd.f32 %v350, %v478
  %v519 = vadd.f32 %v355, %v483
  %v520 = vadd.f32 %v358, %v486
  %v521 = vadd.f32 %v363, %v491
  %v522 = vadd.f32 %v366, %v494
  %v523 = vadd.f32 %v371, %v499
  %v524 = vadd.f32 %v374, %v502
  %v525 = vadd.f32 %v379, %v507
  %v526 = vadd.f32 %v382, %v510
  %v527 = vld [vmem:[%s2] sm:$0x1]
  %v529 = vlaneseq
  %v530 = vshrl.u32 %v529, 7
  %v531 = vsub.s32 0, %v530
  %v532 = vrot.slane %v527, %v531
  %v534 = vadd.f32 %v513, %v532
  %v535 = vadd.f32 %v514, %v532
  %v536 = vadd.f32 %v515, %v532
  %v537 = vadd.f32 %v516, %v532
  %v538 = vadd.f32 %v517, %v532
  %v539 = vadd.f32 %v518, %v532
  %v540 = vadd.f32 %v519, %v532
  %v541 = vadd.f32 %v520, %v532
  %v542 = vadd.f32 %v521, %v532
  %v543 = vadd.f32 %v522, %v532
  %v544 = vadd.f32 %v523, %v532
  %v545 = vadd.f32 %v524, %v532
  %v546 = vadd.f32 %v525, %v532
  %v547 = vadd.f32 %v526, %v532
  %v548 = vmax.f32 %v534, 0.0
  %v549 = vmax.f32 %v535, 0.0
  %v550 = vmax.f32 %v536, 0.0
  %v551 = vmax.f32 %v537, 0.0
  %v552 = vmax.f32 %v538, 0.0
  %v553 = vmax.f32 %v539, 0.0
  %v554 = vmax.f32 %v540, 0.0
  %v555 = vmax.f32 %v541, 0.0
  %v556 = vmax.f32 %v542, 0.0
  %v557 = vmax.f32 %v543, 0.0
  %v558 = vmax.f32 %v544, 0.0
  %v559 = vmax.f32 %v545, 0.0
  %v560 = vmax.f32 %v546, 0.0
  %v561 = vmax.f32 %v547, 0.0
  %v562 = vpack.c.bf16 %v549, %v548
  %v563 = vpack.c.bf16 %v551, %v550
  %v564 = vpack.c.bf16 %v553, %v552
  %v565 = vpack.c.bf16 %v555, %v554
  %v566 = vpack.c.bf16 %v557, %v556
  %v567 = vpack.c.bf16 %v559, %v558
  %v568 = vpack.c.bf16 %v561, %v560
  %v569 = vld [vmem:[%s3] sm:$0xf]
  %v570 = vld [vmem:[%s3 + $0x4] sm:$0xf]
  %v571 = vld [vmem:[%s3 + $0x8] sm:$0xf]
  %v572 = vld [vmem:[%s3 + $0xc] sm:$0xf]
  %v573 = vld [vmem:[%s3 + $0x10] sm:$0xf]
  %v574 = vld [vmem:[%s3 + $0x14] sm:$0xf]
  %v575 = vld [vmem:[%s3 + $0x18] sm:$0xf]
  %s576 = scalar_lea.vmem %s3, 28
  %v577 = vld [vmem:[%s576] sm:$0xf]
  %v578 = vld [vmem:[%s576 + $0x4] sm:$0xf]
  %v579 = vld [vmem:[%s576 + $0x8] sm:$0xf]
  %v580 = vld [vmem:[%s576 + $0xc] sm:$0xf]
  %v581 = vld [vmem:[%s576 + $0x10] sm:$0xf]
  %v582 = vld [vmem:[%s576 + $0x14] sm:$0xf]
  %v583 = vld [vmem:[%s576 + $0x18] sm:$0xf]
  %vm591 = vcmask 1043456
  %v592 = vrot.slane %v562, 4
  %v593 = vrot.slane %v563, 4
  %v594 = vsel %vm591, %v592, %v593
  %v595 = vrot.slane %v564, 4
  %v596 = vsel %vm591, %v593, %v595
  %v597 = vrot.slane %v565, 4
  %v598 = vsel %vm591, %v595, %v597
  %v599 = vrot.slane %v566, 4
  %v600 = vsel %vm591, %v597, %v599
  %v601 = vrot.slane %v567, 4
  %v602 = vsel %vm591, %v599, %v601
  %v603 = vrot.slane %v568, 4
  %v604 = vsel %vm591, %v601, %v603
  %v612 = vunpack.c.l.b16 %v577
  %v613 = vunpack.c.l.b16 %v578
  %v614 = vunpack.c.l.b16 %v579
  %v615 = vunpack.c.l.b16 %v580
  %v616 = vunpack.c.l.b16 %v581
  %v617 = vunpack.c.l.b16 %v582
  %v618 = vunpack.c.l.b16 %v583
  %v619 = vpack.c.b16 %v613, %v612
  %v620 = vpack.c.b16 %v615, %v614
  %v621 = vpack.c.b16 %v617, %v616
  %v622 = vpack.c.b16 %v618, %v618
  %vm626 = vcmask 457728
  %v628 = vsel %vm626, %v594, 0
  %v631 = vsel %vm626, %v596, 0
  %v634 = vsel %vm626, %v598, 0
  %v637 = vsel %vm626, %v600, 0
  %v640 = vsel %vm626, %v602, 0
  %v643 = vsel %vm626, %v604, 0
  %vm645 = vcmask 1043456
  %v647 = vsel %vm645, %v622, 0
  %649 = vmatprep.subr.bf16.mxu0 0
  %650 = vmatpush1.bf16.msra.mxu0 %v619
  %651 = vmatprep.subr.bf16.mxu0 0
  %652 = vmatpush1.bf16.msra.mxu0 %v620
  %653 = vmatprep.subr.bf16.mxu0 0
  %654 = vmatpush1.bf16.msra.mxu0 %v621
  %655 = vmatprep.subr.bf16.mxu0 0
  %656 = vmatpush1.bf16.msra.mxu0 %v647
  %657 = vmatprep.subr.bf16.mxu0 0
  %658 = vmatpush1.bf16.msra.mxu0 0
  %659 = vmatprep.subr.bf16.mxu0 0
  %660 = vmatpush1.bf16.msra.mxu0 0
  %661 = vmatprep.subr.bf16.mxu0 0
  %662 = vmatpush1.bf16.msra.mxu0 0
  %663 = vmatprep.subr.bf16.mxu0 0
  %664 = vmatpush1.bf16.msra.mxu0 0
  %665 = vmatprep.subr.bf16.mxu0 0
  %666 = vmatpush1.bf16.msra.mxu0 0
  %667 = vmatprep.subr.bf16.mxu0 0
  %668 = vmatpush1.bf16.msra.mxu0 0
  %669 = vmatprep.subr.bf16.mxu0 0
  %670 = vmatpush1.bf16.msra.mxu0 0
  %671 = vmatprep.subr.bf16.mxu0 0
  %672 = vmatpush1.bf16.msra.mxu0 0
  %673 = vmatprep.subr.bf16.mxu0 0
  %674 = vmatpush1.bf16.msra.mxu0 0
  %675 = vmatprep.subr.bf16.mxu0 0
  %676 = vmatpush1.bf16.msra.mxu0 0
  %677 = vmatprep.subr.bf16.mxu0 0
  %678 = vmatpush1.bf16.msra.mxu0 0
  %679 = vmatprep.subr.bf16.mxu0 0
  %680 = vmatpush1.bf16.msra.mxu0 0
  %681 = vmatprep.mubr.bf16.mxu0 0
  %682 = vmatmul.mubr.bf16.gmra.mrb[0].mxu0 %v628
  %v683 = vpop.f32.mrb[0].mxu0
  %v684 = vadd.f32 0.0, %v683
  %v685 = vpop.f32.mrb[0].mxu0
  %v686 = vpop.f32.mrb[0].mxu0
  %v687 = vadd.f32 0.0, %v686
  %v688 = vpop.f32.mrb[0].mxu0
  %689 = vmatprep.mubr.bf16.mxu0 0
  %690 = vmatmul.mubr.bf16.gmra.mrb[0].mxu0 %v631
  %v691 = vpop.f32.mrb[0].mxu0
  %v692 = vadd.f32 0.0, %v691
  %v693 = vpop.f32.mrb[0].mxu0
  %v694 = vpop.f32.mrb[0].mxu0
  %v695 = vadd.f32 0.0, %v694
  %v696 = vpop.f32.mrb[0].mxu0
  %697 = vmatprep.mubr.bf16.mxu0 0
  %698 = vmatmul.mubr.bf16.gmra.mrb[0].mxu0 %v634
  %v699 = vpop.f32.mrb[0].mxu0
  %v700 = vadd.f32 0.0, %v699
  %v701 = vpop.f32.mrb[0].mxu0
  %v702 = vpop.f32.mrb[0].mxu0
  %v703 = vadd.f32 0.0, %v702
  %v704 = vpop.f32.mrb[0].mxu0
  %705 = vmatprep.mubr.bf16.mxu0 0
  %706 = vmatmul.mubr.bf16.gmra.mrb[0].mxu0 %v637
  %v707 = vpop.f32.mrb[0].mxu0
  %v708 = vadd.f32 0.0, %v707
  %v709 = vpop.f32.mrb[0].mxu0
  %v710 = vpop.f32.mrb[0].mxu0
  %v711 = vadd.f32 0.0, %v710
  %v712 = vpop.f32.mrb[0].mxu0
  %713 = vmatprep.mubr.bf16.mxu0 0
  %714 = vmatmul.mubr.bf16.gmra.mrb[0].mxu0 %v640
  %v715 = vpop.f32.mrb[0].mxu0
  %v716 = vadd.f32 0.0, %v715
  %v717 = vpop.f32.mrb[0].mxu0
  %v718 = vpop.f32.mrb[0].mxu0
  %v719 = vadd.f32 0.0, %v718
  %v720 = vpop.f32.mrb[0].mxu0
  %721 = vmatprep.mubr.bf16.mxu0 0
  %722 = vmatmul.mubr.bf16.gmra.mrb[0].mxu0 %v643
  %v723 = vpop.f32.mrb[0].mxu0
  %v724 = vadd.f32 0.0, %v723
  %v725 = vpop.f32.mrb[0].mxu0
  %v726 = vpop.f32.mrb[0].mxu0
  %v727 = vadd.f32 0.0, %v726
  %v728 = vpop.f32.mrb[0].mxu0
  %729 = vdwg.mxu0
  %v737 = vunpack.c.l.b16 %v569
  %v738 = vunpack.c.l.b16 %v570
  %v739 = vunpack.c.l.b16 %v571
  %v740 = vunpack.c.l.b16 %v572
  %v741 = vunpack.c.l.b16 %v573
  %v742 = vunpack.c.l.b16 %v574
  %v743 = vunpack.c.l.b16 %v575
  %v744 = vpack.c.b16 %v738, %v737
  %v745 = vpack.c.b16 %v740, %v739
  %v746 = vpack.c.b16 %v742, %v741
  %v747 = vpack.c.b16 %v743, %v743
  %v752 = vsel %vm626, %v562, 0
  %v755 = vsel %vm626, %v563, 0
  %v758 = vsel %vm626, %v564, 0
  %v761 = vsel %vm626, %v565, 0
  %v764 = vsel %vm626, %v566, 0
  %v767 = vsel %vm626, %v567, 0
  %v770 = vsel %vm645, %v747, 0
  %772 = vmatprep.subr.bf16.mxu0 0
  %773 = vmatpush1.bf16.msra.mxu0 %v744
  %774 = vmatprep.subr.bf16.mxu0 0
  %775 = vmatpush1.bf16.msra.mxu0 %v745
  %776 = vmatprep.subr.bf16.mxu0 0
  %777 = vmatpush1.bf16.msra.mxu0 %v746
  %778 = vmatprep.subr.bf16.mxu0 0
  %779 = vmatpush1.bf16.msra.mxu0 %v770
  %780 = vmatprep.subr.bf16.mxu0 0
  %781 = vmatpush1.bf16.msra.mxu0 0
  %782 = vmatprep.subr.bf16.mxu0 0
  %783 = vmatpush1.bf16.msra.mxu0 0
  %784 = vmatprep.subr.bf16.mxu0 0
  %785 = vmatpush1.bf16.msra.mxu0 0
  %786 = vmatprep.subr.bf16.mxu0 0
  %787 = vmatpush1.bf16.msra.mxu0 0
  %788 = vmatprep.subr.bf16.mxu0 0
  %789 = vmatpush1.bf16.msra.mxu0 0
  %790 = vmatprep.subr.bf16.mxu0 0
  %791 = vmatpush1.bf16.msra.mxu0 0
  %792 = vmatprep.subr.bf16.mxu0 0
  %793 = vmatpush1.bf16.msra.mxu0 0
  %794 = vmatprep.subr.bf16.mxu0 0
  %795 = vmatpush1.bf16.msra.mxu0 0
  %796 = vmatprep.subr.bf16.mxu0 0
  %797 = vmatpush1.bf16.msra.mxu0 0
  %798 = vmatprep.subr.bf16.mxu0 0
  %799 = vmatpush1.bf16.msra.mxu0 0
  %800 = vmatprep.subr.bf16.mxu0 0
  %801 = vmatpush1.bf16.msra.mxu0 0
  %802 = vmatprep.subr.bf16.mxu0 0
  %803 = vmatpush1.bf16.msra.mxu0 0
  %804 = vmatprep.mubr.bf16.mxu0 0
  %805 = vmatmul.mubr.bf16.gmra.mrb[0].mxu0 %v752
  %v806 = vpop.f32.mrb[0].mxu0
  %v807 = vadd.f32 %v684, %v806
  %v808 = vpop.f32.mrb[0].mxu0
  %v809 = vpop.f32.mrb[0].mxu0
  %v810 = vadd.f32 %v687, %v809
  %v811 = vpop.f32.mrb[0].mxu0
  %812 = vmatprep.mubr.bf16.mxu0 0
  %813 = vmatmul.mubr.bf16.gmra.mrb[0].mxu0 %v755
  %v814 = vpop.f32.mrb[0].mxu0
  %v815 = vadd.f32 %v692, %v814
  %v816 = vpop.f32.mrb[0].mxu0
  %v817 = vpop.f32.mrb[0].mxu0
  %v818 = vadd.f32 %v695, %v817
  %v819 = vpop.f32.mrb[0].mxu0
  %820 = vmatprep.mubr.bf16.mxu0 0
  %821 = vmatmul.mubr.bf16.gmra.mrb[0].mxu0 %v758
  %v822 = vpop.f32.mrb[0].mxu0
  %v823 = vadd.f32 %v700, %v822
  %v824 = vpop.f32.mrb[0].mxu0
  %v825 = vpop.f32.mrb[0].mxu0
  %v826 = vadd.f32 %v703, %v825
  %v827 = vpop.f32.mrb[0].mxu0
  %828 = vmatprep.mubr.bf16.mxu0 0
  %829 = vmatmul.mubr.bf16.gmra.mrb[0].mxu0 %v761
  %v830 = vpop.f32.mrb[0].mxu0
  %v831 = vadd.f32 %v708, %v830
  %v832 = vpop.f32.mrb[0].mxu0
  %v833 = vpop.f32.mrb[0].mxu0
  %v834 = vadd.f32 %v711, %v833
  %v835 = vpop.f32.mrb[0].mxu0
  %836 = vmatprep.mubr.bf16.mxu0 0
  %837 = vmatmul.mubr.bf16.gmra.mrb[0].mxu0 %v764
  %v838 = vpop.f32.mrb[0].mxu0
  %v839 = vadd.f32 %v716, %v838
  %v840 = vpop.f32.mrb[0].mxu0
  %v841 = vpop.f32.mrb[0].mxu0
  %v842 = vadd.f32 %v719, %v841
  %v843 = vpop.f32.mrb[0].mxu0
  %844 = vmatprep.mubr.bf16.mxu0 0
  %845 = vmatmul.mubr.bf16.gmra.mrb[0].mxu0 %v767
  %v846 = vpop.f32.mrb[0].mxu0
  %v847 = vadd.f32 %v724, %v846
  %v848 = vpop.f32.mrb[0].mxu0
  %v849 = vpop.f32.mrb[0].mxu0
  %v850 = vadd.f32 %v727, %v849
  %v851 = vpop.f32.mrb[0].mxu0
  %852 = vdwg.mxu0
  %s853 = scalar_lea.vmem %s3, 56
  %v854 = vld [vmem:[%s853] sm:$0xf]
  %v855 = vld [vmem:[%s853 + $0x4] sm:$0xf]
  %v856 = vld [vmem:[%s853 + $0x8] sm:$0xf]
  %v857 = vld [vmem:[%s853 + $0xc] sm:$0xf]
  %v858 = vld [vmem:[%s853 + $0x10] sm:$0xf]
  %v859 = vld [vmem:[%s853 + $0x14] sm:$0xf]
  %v860 = vld [vmem:[%s853 + $0x18] sm:$0xf]
  %v868 = vunpack.c.l.b16 %v854
  %v869 = vunpack.c.l.b16 %v855
  %v870 = vunpack.c.l.b16 %v856
  %v871 = vunpack.c.l.b16 %v857
  %v872 = vunpack.c.l.b16 %v858
  %v873 = vunpack.c.l.b16 %v859
  %v874 = vunpack.c.l.b16 %v860
  %v875 = vpack.c.b16 %v869, %v868
  %v876 = vpack.c.b16 %v871, %v870
  %v877 = vpack.c.b16 %v873, %v872
  %v878 = vpack.c.b16 %v874, %v874
  %v883 = vsel %vm626, %v568, 0
  %v886 = vsel %vm645, %v878, 0
  %888 = vmatprep.subr.bf16.mxu0 0
  %889 = vmatpush1.bf16.msra.mxu0 %v875
  %890 = vmatprep.subr.bf16.mxu0 0
  %891 = vmatpush1.bf16.msra.mxu0 %v876
  %892 = vmatprep.subr.bf16.mxu0 0
  %893 = vmatpush1.bf16.msra.mxu0 %v877
  %894 = vmatprep.subr.bf16.mxu0 0
  %895 = vmatpush1.bf16.msra.mxu0 %v886
  %896 = vmatprep.subr.bf16.mxu0 0
  %897 = vmatpush1.bf16.msra.mxu0 0
  %898 = vmatprep.subr.bf16.mxu0 0
  %899 = vmatpush1.bf16.msra.mxu0 0
  %900 = vmatprep.subr.bf16.mxu0 0
  %901 = vmatpush1.bf16.msra.mxu0 0
  %902 = vmatprep.subr.bf16.mxu0 0
  %903 = vmatpush1.bf16.msra.mxu0 0
  %904 = vmatprep.subr.bf16.mxu0 0
  %905 = vmatpush1.bf16.msra.mxu0 0
  %906 = vmatprep.subr.bf16.mxu0 0
  %907 = vmatpush1.bf16.msra.mxu0 0
  %908 = vmatprep.subr.bf16.mxu0 0
  %909 = vmatpush1.bf16.msra.mxu0 0
  %910 = vmatprep.subr.bf16.mxu0 0
  %911 = vmatpush1.bf16.msra.mxu0 0
  %912 = vmatprep.subr.bf16.mxu0 0
  %913 = vmatpush1.bf16.msra.mxu0 0
  %914 = vmatprep.subr.bf16.mxu0 0
  %915 = vmatpush1.bf16.msra.mxu0 0
  %916 = vmatprep.subr.bf16.mxu0 0
  %917 = vmatpush1.bf16.msra.mxu0 0
  %918 = vmatprep.subr.bf16.mxu0 0
  %919 = vmatpush1.bf16.msra.mxu0 0
  %920 = vmatprep.mubr.bf16.mxu0 0
  %921 = vmatmul.mubr.bf16.gmra.mrb[0].mxu0 %v755
  %v922 = vpop.f32.mrb[0].mxu0
  %v923 = vadd.f32 0.0, %v922
  %v924 = vpop.f32.mrb[0].mxu0
  %v925 = vpop.f32.mrb[0].mxu0
  %v926 = vadd.f32 0.0, %v925
  %v927 = vpop.f32.mrb[0].mxu0
  %928 = vmatprep.mubr.bf16.mxu0 0
  %929 = vmatmul.mubr.bf16.gmra.mrb[0].mxu0 %v758
  %v930 = vpop.f32.mrb[0].mxu0
  %v931 = vadd.f32 0.0, %v930
  %v932 = vpop.f32.mrb[0].mxu0
  %v933 = vpop.f32.mrb[0].mxu0
  %v934 = vadd.f32 0.0, %v933
  %v935 = vpop.f32.mrb[0].mxu0
  %936 = vmatprep.mubr.bf16.mxu0 0
  %937 = vmatmul.mubr.bf16.gmra.mrb[0].mxu0 %v761
  %v938 = vpop.f32.mrb[0].mxu0
  %v939 = vadd.f32 0.0, %v938
  %v940 = vpop.f32.mrb[0].mxu0
  %v941 = vpop.f32.mrb[0].mxu0
  %v942 = vadd.f32 0.0, %v941
  %v943 = vpop.f32.mrb[0].mxu0
  %944 = vmatprep.mubr.bf16.mxu0 0
  %945 = vmatmul.mubr.bf16.gmra.mrb[0].mxu0 %v764
  %v946 = vpop.f32.mrb[0].mxu0
  %v947 = vadd.f32 0.0, %v946
  %v948 = vpop.f32.mrb[0].mxu0
  %v949 = vpop.f32.mrb[0].mxu0
  %v950 = vadd.f32 0.0, %v949
  %v951 = vpop.f32.mrb[0].mxu0
  %952 = vmatprep.mubr.bf16.mxu0 0
  %953 = vmatmul.mubr.bf16.gmra.mrb[0].mxu0 %v767
  %v954 = vpop.f32.mrb[0].mxu0
  %v955 = vadd.f32 0.0, %v954
  %v956 = vpop.f32.mrb[0].mxu0
  %v957 = vpop.f32.mrb[0].mxu0
  %v958 = vadd.f32 0.0, %v957
  %v959 = vpop.f32.mrb[0].mxu0
  %960 = vmatprep.mubr.bf16.mxu0 0
  %961 = vmatmul.mubr.bf16.gmra.mrb[0].mxu0 %v883
  %v962 = vpop.f32.mrb[0].mxu0
  %v963 = vadd.f32 0.0, %v962
  %v964 = vpop.f32.mrb[0].mxu0
  %v965 = vpop.f32.mrb[0].mxu0
  %v966 = vadd.f32 0.0, %v965
  %v967 = vpop.f32.mrb[0].mxu0
  %968 = vdwg.mxu0
  %v969 = vadd.f32 %v807, %v923
  %v970 = vadd.f32 %v810, %v926
  %v971 = vadd.f32 %v815, %v931
  %v972 = vadd.f32 %v818, %v934
  %v973 = vadd.f32 %v823, %v939
  %v974 = vadd.f32 %v826, %v942
  %v975 = vadd.f32 %v831, %v947
  %v976 = vadd.f32 %v834, %v950
  %v977 = vadd.f32 %v839, %v955
  %v978 = vadd.f32 %v842, %v958
  %v979 = vadd.f32 %v847, %v963
  %v980 = vadd.f32 %v850, %v966
  %v981 = vld [vmem:[%s4] sm:$0x1]
  %v983 = vlaneseq
  %v984 = vshrl.u32 %v983, 7
  %v985 = vsub.s32 0, %v984
  %v986 = vrot.slane %v981, %v985
  %v988 = vadd.f32 %v969, %v986
  %v989 = vadd.f32 %v970, %v986
  %v990 = vadd.f32 %v971, %v986
  %v991 = vadd.f32 %v972, %v986
  %v992 = vadd.f32 %v973, %v986
  %v993 = vadd.f32 %v974, %v986
  %v994 = vadd.f32 %v975, %v986
  %v995 = vadd.f32 %v976, %v986
  %v996 = vadd.f32 %v977, %v986
  %v997 = vadd.f32 %v978, %v986
  %v998 = vadd.f32 %v979, %v986
  %v999 = vadd.f32 %v980, %v986
  %v1000 = vmax.f32 %v988, 0.0
  %v1001 = vmax.f32 %v989, 0.0
  %v1002 = vmax.f32 %v990, 0.0
  %v1003 = vmax.f32 %v991, 0.0
  %v1004 = vmax.f32 %v992, 0.0
  %v1005 = vmax.f32 %v993, 0.0
  %v1006 = vmax.f32 %v994, 0.0
  %v1007 = vmax.f32 %v995, 0.0
  %v1008 = vmax.f32 %v996, 0.0
  %v1009 = vmax.f32 %v997, 0.0
  %v1010 = vmax.f32 %v998, 0.0
  %v1011 = vmax.f32 %v999, 0.0
  %v1012 = vpack.c.bf16 %v1000, %v1000
  %v1013 = vpack.c.bf16 %v1001, %v1001
  %v1014 = vpack.c.bf16 %v1002, %v1002
  %v1015 = vpack.c.bf16 %v1003, %v1003
  %v1016 = vpack.c.bf16 %v1004, %v1004
  %v1017 = vpack.c.bf16 %v1005, %v1005
  %v1018 = vpack.c.bf16 %v1006, %v1006
  %v1019 = vpack.c.bf16 %v1007, %v1007
  %v1020 = vpack.c.bf16 %v1008, %v1008
  %v1021 = vpack.c.bf16 %v1009, %v1009
  %v1022 = vpack.c.bf16 %v1010, %v1010
  %v1023 = vpack.c.bf16 %v1011, %v1011
  %v1024 = vld [vmem:[%s5] sm:$0xf]
  %v1025 = vld [vmem:[%s5 + $0x4] sm:$0xf]
  %v1026 = vld [vmem:[%s5 + $0x8] sm:$0xf]
  %v1027 = vld [vmem:[%s5 + $0xc] sm:$0xf]
  %v1028 = vld [vmem:[%s5 + $0x10] sm:$0xf]
  %v1029 = vld [vmem:[%s5 + $0x14] sm:$0xf]
  %v1030 = vld [vmem:[%s5 + $0x18] sm:$0xf]
  %v1031 = vld [vmem:[%s5 + $0x1c] sm:$0xf]
  %v1032 = vld [vmem:[%s5 + $0x20] sm:$0xf]
  %v1033 = vld [vmem:[%s5 + $0x24] sm:$0xf]
  %v1034 = vld [vmem:[%s5 + $0x28] sm:$0xf]
  %v1035 = vld [vmem:[%s5 + $0x2c] sm:$0xf]
  %v1036 = vld [vmem:[%s5 + $0x30] sm:$0xf]
  %v1037 = vld [vmem:[%s5 + $0x34] sm:$0xf]
  %v1038 = vld [vmem:[%s5 + $0x38] sm:$0xf]
  %v1039 = vld [vmem:[%s5 + $0x3c] sm:$0xf]
  %v1040 = vld [vmem:[%s5 + $0x40] sm:$0xf]
  %v1041 = vld [vmem:[%s5 + $0x44] sm:$0xf]
  %v1042 = vld [vmem:[%s5 + $0x48] sm:$0xf]
  %v1043 = vld [vmem:[%s5 + $0x4c] sm:$0xf]
  %v1044 = vld [vmem:[%s5 + $0x50] sm:$0xf]
  %v1045 = vld [vmem:[%s5 + $0x54] sm:$0xf]
  %v1046 = vld [vmem:[%s5 + $0x58] sm:$0xf]
  %v1047 = vld [vmem:[%s5 + $0x5c] sm:$0xf]
  %v1048 = vld [vmem:[%s5 + $0x60] sm:$0xf]
  %v1049 = vld [vmem:[%s5 + $0x64] sm:$0xf]
  %v1050 = vld [vmem:[%s5 + $0x68] sm:$0xf]
  %v1051 = vld [vmem:[%s5 + $0x6c] sm:$0xf]
  %v1052 = vld [vmem:[%s5 + $0x70] sm:$0xf]
  %v1053 = vld [vmem:[%s5 + $0x74] sm:$0xf]
  %v1054 = vld [vmem:[%s5 + $0x78] sm:$0xf]
  %v1055 = vld [vmem:[%s5 + $0x7c] sm:$0xf]
  %v1056 = vld [vmem:[%s5 + $0x80] sm:$0xf]
  %v1057 = vld [vmem:[%s5 + $0x84] sm:$0xf]
  %v1058 = vld [vmem:[%s5 + $0x88] sm:$0xf]
  %v1059 = vld [vmem:[%s5 + $0x8c] sm:$0xf]
  %v1060 = vld [vmem:[%s5 + $0x90] sm:$0xf]
  %v1061 = vld [vmem:[%s5 + $0x94] sm:$0xf]
  %v1062 = vld [vmem:[%s5 + $0x98] sm:$0xf]
  %v1063 = vld [vmem:[%s5 + $0x9c] sm:$0xf]
  %v1064 = vld [vmem:[%s5 + $0xa0] sm:$0xf]
  %v1065 = vld [vmem:[%s5 + $0xa4] sm:$0xf]
  %v1066 = vld [vmem:[%s5 + $0xa8] sm:$0xf]
  %v1067 = vld [vmem:[%s5 + $0xac] sm:$0xf]
  %v1068 = vld [vmem:[%s5 + $0xb0] sm:$0xf]
  %v1069 = vld [vmem:[%s5 + $0xb4] sm:$0xf]
  %v1070 = vld [vmem:[%s5 + $0xb8] sm:$0xf]
  %v1071 = vld [vmem:[%s5 + $0xbc] sm:$0xf]
  %v1072 = vld [vmem:[%s5 + $0xc0] sm:$0xf]
  %v1073 = vld [vmem:[%s5 + $0xc4] sm:$0xf]
  %v1074 = vld [vmem:[%s5 + $0xc8] sm:$0xf]
  %v1075 = vld [vmem:[%s5 + $0xcc] sm:$0xf]
  %v1076 = vld [vmem:[%s5 + $0xd0] sm:$0xf]
  %v1077 = vld [vmem:[%s5 + $0xd4] sm:$0xf]
  %v1078 = vld [vmem:[%s5 + $0xd8] sm:$0xf]
  %v1079 = vld [vmem:[%s5 + $0xdc] sm:$0xf]
  %v1080 = vld [vmem:[%s5 + $0xe0] sm:$0xf]
  %v1081 = vld [vmem:[%s5 + $0xe4] sm:$0xf]
  %v1082 = vld [vmem:[%s5 + $0xe8] sm:$0xf]
  %v1083 = vld [vmem:[%s5 + $0xec] sm:$0xf]
  %v1084 = vld [vmem:[%s5 + $0xf0] sm:$0xf]
  %v1085 = vld [vmem:[%s5 + $0xf4] sm:$0xf]
  %v1086 = vld [vmem:[%s5 + $0xf8] sm:$0xf]
  %v1087 = vld [vmem:[%s5 + $0xfc] sm:$0xf]
  %v1088 = vld [vmem:[%s5 + $0x100] sm:$0xf]
  %v1089 = vld [vmem:[%s5 + $0x104] sm:$0xf]
  %v1090 = vld [vmem:[%s5 + $0x108] sm:$0xf]
  %v1091 = vld [vmem:[%s5 + $0x10c] sm:$0xf]
  %v1092 = vld [vmem:[%s5 + $0x110] sm:$0xf]
  %v1093 = vld [vmem:[%s5 + $0x114] sm:$0xf]
  %v1094 = vld [vmem:[%s5 + $0x118] sm:$0xf]
  %v1095 = vld [vmem:[%s5 + $0x11c] sm:$0xf]
  %v1102 = vunpack.c.l.b16 %v1024
  %v1103 = vunpack.c.l.b16 %v1025
  %v1104 = vunpack.c.l.b16 %v1026
  %v1105 = vunpack.c.l.b16 %v1027
  %v1106 = vunpack.c.l.b16 %v1028
  %v1107 = vunpack.c.l.b16 %v1029
  %v1108 = vpack.c.b16 %v1103, %v1102
  %v1109 = vpack.c.b16 %v1105, %v1104
  %v1110 = vpack.c.b16 %v1107, %v1106
  %vm1114 = vcmask 392192
  %v1116 = vsel %vm1114, %v1012, 0
  %1118 = vmatprep.subr.bf16.mxu0 0
  %1119 = vmatpush1.bf16.msra.mxu0 %v1108
  %1120 = vmatprep.subr.bf16.mxu0 0
  %1121 = vmatpush1.bf16.msra.mxu0 %v1109
  %1122 = vmatprep.subr.bf16.mxu0 0
  %1123 = vmatpush1.bf16.msra.mxu0 %v1110
  %1124 = vmatprep.subr.bf16.mxu0 0
  %1125 = vmatpush1.bf16.msra.mxu0 0
  %1126 = vmatprep.subr.bf16.mxu0 0
  %1127 = vmatpush1.bf16.msra.mxu0 0
  %1128 = vmatprep.subr.bf16.mxu0 0
  %1129 = vmatpush1.bf16.msra.mxu0 0
  %1130 = vmatprep.subr.bf16.mxu0 0
  %1131 = vmatpush1.bf16.msra.mxu0 0
  %1132 = vmatprep.subr.bf16.mxu0 0
  %1133 = vmatpush1.bf16.msra.mxu0 0
  %1134 = vmatprep.subr.bf16.mxu0 0
  %1135 = vmatpush1.bf16.msra.mxu0 0
  %1136 = vmatprep.subr.bf16.mxu0 0
  %1137 = vmatpush1.bf16.msra.mxu0 0
  %1138 = vmatprep.subr.bf16.mxu0 0
  %1139 = vmatpush1.bf16.msra.mxu0 0
  %1140 = vmatprep.subr.bf16.mxu0 0
  %1141 = vmatpush1.bf16.msra.mxu0 0
  %1142 = vmatprep.subr.bf16.mxu0 0
  %1143 = vmatpush1.bf16.msra.mxu0 0
  %1144 = vmatprep.subr.bf16.mxu0 0
  %1145 = vmatpush1.bf16.msra.mxu0 0
  %1146 = vmatprep.subr.bf16.mxu0 0
  %1147 = vmatpush1.bf16.msra.mxu0 0
  %1148 = vmatprep.subr.bf16.mxu0 0
  %1149 = vmatpush1.bf16.msra.mxu0 0
  %1150 = vmatprep.mubr.bf16.mxu0 0
  %1151 = vmatmul.mubr.bf16.gmra.mrb[0].mxu0 %v1116
  %v1152 = vpop.f32.mrb[0].mxu0
  %v1153 = vadd.f32 0.0, %v1152
  %v1154 = vpop.f32.mrb[0].mxu0
  %v1155 = vpop.f32.mrb[0].mxu0
  %v1156 = vpop.f32.mrb[0].mxu0
  %1157 = vdwg.mxu0
  %v1164 = vunpack.c.l.b16 %v1030
  %v1165 = vunpack.c.l.b16 %v1031
  %v1166 = vunpack.c.l.b16 %v1032
  %v1167 = vunpack.c.l.b16 %v1033
  %v1168 = vunpack.c.l.b16 %v1034
  %v1169 = vunpack.c.l.b16 %v1035
  %v1170 = vpack.c.b16 %v1165, %v1164
  %v1171 = vpack.c.b16 %v1167, %v1166
  %v1172 = vpack.c.b16 %v1169, %v1168
  %v1177 = vsel %vm1114, %v1013, 0
  %1179 = vmatprep.subr.bf16.mxu0 0
  %1180 = vmatpush1.bf16.msra.mxu0 %v1170
  %1181 = vmatprep.subr.bf16.mxu0 0
  %1182 = vmatpush1.bf16.msra.mxu0 %v1171
  %1183 = vmatprep.subr.bf16.mxu0 0
  %1184 = vmatpush1.bf16.msra.mxu0 %v1172
  %1185 = vmatprep.subr.bf16.mxu0 0
  %1186 = vmatpush1.bf16.msra.mxu0 0
  %1187 = vmatprep.subr.bf16.mxu0 0
  %1188 = vmatpush1.bf16.msra.mxu0 0
  %1189 = vmatprep.subr.bf16.mxu0 0
  %1190 = vmatpush1.bf16.msra.mxu0 0
  %1191 = vmatprep.subr.bf16.mxu0 0
  %1192 = vmatpush1.bf16.msra.mxu0 0
  %1193 = vmatprep.subr.bf16.mxu0 0
  %1194 = vmatpush1.bf16.msra.mxu0 0
  %1195 = vmatprep.subr.bf16.mxu0 0
  %1196 = vmatpush1.bf16.msra.mxu0 0
  %1197 = vmatprep.subr.bf16.mxu0 0
  %1198 = vmatpush1.bf16.msra.mxu0 0
  %1199 = vmatprep.subr.bf16.mxu0 0
  %1200 = vmatpush1.bf16.msra.mxu0 0
  %1201 = vmatprep.subr.bf16.mxu0 0
  %1202 = vmatpush1.bf16.msra.mxu0 0
  %1203 = vmatprep.subr.bf16.mxu0 0
  %1204 = vmatpush1.bf16.msra.mxu0 0
  %1205 = vmatprep.subr.bf16.mxu0 0
  %1206 = vmatpush1.bf16.msra.mxu0 0
  %1207 = vmatprep.subr.bf16.mxu0 0
  %1208 = vmatpush1.bf16.msra.mxu0 0
  %1209 = vmatprep.subr.bf16.mxu0 0
  %1210 = vmatpush1.bf16.msra.mxu0 0
  %1211 = vmatprep.mubr.bf16.mxu0 0
  %1212 = vmatmul.mubr.bf16.gmra.mrb[0].mxu0 %v1177
  %v1213 = vpop.f32.mrb[0].mxu0
  %v1214 = vadd.f32 0.0, %v1213
  %v1215 = vpop.f32.mrb[0].mxu0
  %v1216 = vpop.f32.mrb[0].mxu0
  %v1217 = vpop.f32.mrb[0].mxu0
  %1218 = vdwg.mxu0
  %v1225 = vunpack.c.l.b16 %v1036
  %v1226 = vunpack.c.l.b16 %v1037
  %v1227 = vunpack.c.l.b16 %v1038
  %v1228 = vunpack.c.l.b16 %v1039
  %v1229 = vunpack.c.l.b16 %v1040
  %v1230 = vunpack.c.l.b16 %v1041
  %v1231 = vpack.c.b16 %v1226, %v1225
  %v1232 = vpack.c.b16 %v1228, %v1227
  %v1233 = vpack.c.b16 %v1230, %v1229
  %v1238 = vsel %vm1114, %v1014, 0
  %1240 = vmatprep.subr.bf16.mxu0 0
  %1241 = vmatpush1.bf16.msra.mxu0 %v1231
  %1242 = vmatprep.subr.bf16.mxu0 0
  %1243 = vmatpush1.bf16.msra.mxu0 %v1232
  %1244 = vmatprep.subr.bf16.mxu0 0
  %1245 = vmatpush1.bf16.msra.mxu0 %v1233
  %1246 = vmatprep.subr.bf16.mxu0 0
  %1247 = vmatpush1.bf16.msra.mxu0 0
  %1248 = vmatprep.subr.bf16.mxu0 0
  %1249 = vmatpush1.bf16.msra.mxu0 0
  %1250 = vmatprep.subr.bf16.mxu0 0
  %1251 = vmatpush1.bf16.msra.mxu0 0
  %1252 = vmatprep.subr.bf16.mxu0 0
  %1253 = vmatpush1.bf16.msra.mxu0 0
  %1254 = vmatprep.subr.bf16.mxu0 0
  %1255 = vmatpush1.bf16.msra.mxu0 0
  %1256 = vmatprep.subr.bf16.mxu0 0
  %1257 = vmatpush1.bf16.msra.mxu0 0
  %1258 = vmatprep.subr.bf16.mxu0 0
  %1259 = vmatpush1.bf16.msra.mxu0 0
  %1260 = vmatprep.subr.bf16.mxu0 0
  %1261 = vmatpush1.bf16.msra.mxu0 0
  %1262 = vmatprep.subr.bf16.mxu0 0
  %1263 = vmatpush1.bf16.msra.mxu0 0
  %1264 = vmatprep.subr.bf16.mxu0 0
  %1265 = vmatpush1.bf16.msra.mxu0 0
  %1266 = vmatprep.subr.bf16.mxu0 0
  %1267 = vmatpush1.bf16.msra.mxu0 0
  %1268 = vmatprep.subr.bf16.mxu0 0
  %1269 = vmatpush1.bf16.msra.mxu0 0
  %1270 = vmatprep.subr.bf16.mxu0 0
  %1271 = vmatpush1.bf16.msra.mxu0 0
  %1272 = vmatprep.mubr.bf16.mxu0 0
  %1273 = vmatmul.mubr.bf16.gmra.mrb[0].mxu0 %v1238
  %v1274 = vpop.f32.mrb[0].mxu0
  %v1275 = vadd.f32 0.0, %v1274
  %v1276 = vpop.f32.mrb[0].mxu0
  %v1277 = vpop.f32.mrb[0].mxu0
  %v1278 = vpop.f32.mrb[0].mxu0
  %1279 = vdwg.mxu0
  %v1286 = vunpack.c.l.b16 %v1042
  %v1287 = vunpack.c.l.b16 %v1043
  %v1288 = vunpack.c.l.b16 %v1044
  %v1289 = vunpack.c.l.b16 %v1045
  %v1290 = vunpack.c.l.b16 %v1046
  %v1291 = vunpack.c.l.b16 %v1047
  %v1292 = vpack.c.b16 %v1287, %v1286
  %v1293 = vpack.c.b16 %v1289, %v1288
  %v1294 = vpack.c.b16 %v1291, %v1290
  %v1299 = vsel %vm1114, %v1015, 0
  %1301 = vmatprep.subr.bf16.mxu0 0
  %1302 = vmatpush1.bf16.msra.mxu0 %v1292
  %1303 = vmatprep.subr.bf16.mxu0 0
  %1304 = vmatpush1.bf16.msra.mxu0 %v1293
  %1305 = vmatprep.subr.bf16.mxu0 0
  %1306 = vmatpush1.bf16.msra.mxu0 %v1294
  %1307 = vmatprep.subr.bf16.mxu0 0
  %1308 = vmatpush1.bf16.msra.mxu0 0
  %1309 = vmatprep.subr.bf16.mxu0 0
  %1310 = vmatpush1.bf16.msra.mxu0 0
  %1311 = vmatprep.subr.bf16.mxu0 0
  %1312 = vmatpush1.bf16.msra.mxu0 0
  %1313 = vmatprep.subr.bf16.mxu0 0
  %1314 = vmatpush1.bf16.msra.mxu0 0
  %1315 = vmatprep.subr.bf16.mxu0 0
  %1316 = vmatpush1.bf16.msra.mxu0 0
  %1317 = vmatprep.subr.bf16.mxu0 0
  %1318 = vmatpush1.bf16.msra.mxu0 0
  %1319 = vmatprep.subr.bf16.mxu0 0
  %1320 = vmatpush1.bf16.msra.mxu0 0
  %1321 = vmatprep.subr.bf16.mxu0 0
  %1322 = vmatpush1.bf16.msra.mxu0 0
  %1323 = vmatprep.subr.bf16.mxu0 0
  %1324 = vmatpush1.bf16.msra.mxu0 0
  %1325 = vmatprep.subr.bf16.mxu0 0
  %1326 = vmatpush1.bf16.msra.mxu0 0
  %1327 = vmatprep.subr.bf16.mxu0 0
  %1328 = vmatpush1.bf16.msra.mxu0 0
  %1329 = vmatprep.subr.bf16.mxu0 0
  %1330 = vmatpush1.bf16.msra.mxu0 0
  %1331 = vmatprep.subr.bf16.mxu0 0
  %1332 = vmatpush1.bf16.msra.mxu0 0
  %1333 = vmatprep.mubr.bf16.mxu0 0
  %1334 = vmatmul.mubr.bf16.gmra.mrb[0].mxu0 %v1299
  %v1335 = vpop.f32.mrb[0].mxu0
  %v1336 = vadd.f32 0.0, %v1335
  %v1337 = vpop.f32.mrb[0].mxu0
  %v1338 = vpop.f32.mrb[0].mxu0
  %v1339 = vpop.f32.mrb[0].mxu0
  %1340 = vdwg.mxu0
  %v1347 = vunpack.c.l.b16 %v1048
  %v1348 = vunpack.c.l.b16 %v1049
  %v1349 = vunpack.c.l.b16 %v1050
  %v1350 = vunpack.c.l.b16 %v1051
  %v1351 = vunpack.c.l.b16 %v1052
  %v1352 = vunpack.c.l.b16 %v1053
  %v1353 = vpack.c.b16 %v1348, %v1347
  %v1354 = vpack.c.b16 %v1350, %v1349
  %v1355 = vpack.c.b16 %v1352, %v1351
  %v1360 = vsel %vm1114, %v1016, 0
  %1362 = vmatprep.subr.bf16.mxu0 0
  %1363 = vmatpush1.bf16.msra.mxu0 %v1353
  %1364 = vmatprep.subr.bf16.mxu0 0
  %1365 = vmatpush1.bf16.msra.mxu0 %v1354
  %1366 = vmatprep.subr.bf16.mxu0 0
  %1367 = vmatpush1.bf16.msra.mxu0 %v1355
  %1368 = vmatprep.subr.bf16.mxu0 0
  %1369 = vmatpush1.bf16.msra.mxu0 0
  %1370 = vmatprep.subr.bf16.mxu0 0
  %1371 = vmatpush1.bf16.msra.mxu0 0
  %1372 = vmatprep.subr.bf16.mxu0 0
  %1373 = vmatpush1.bf16.msra.mxu0 0
  %1374 = vmatprep.subr.bf16.mxu0 0
  %1375 = vmatpush1.bf16.msra.mxu0 0
  %1376 = vmatprep.subr.bf16.mxu0 0
  %1377 = vmatpush1.bf16.msra.mxu0 0
  %1378 = vmatprep.subr.bf16.mxu0 0
  %1379 = vmatpush1.bf16.msra.mxu0 0
  %1380 = vmatprep.subr.bf16.mxu0 0
  %1381 = vmatpush1.bf16.msra.mxu0 0
  %1382 = vmatprep.subr.bf16.mxu0 0
  %1383 = vmatpush1.bf16.msra.mxu0 0
  %1384 = vmatprep.subr.bf16.mxu0 0
  %1385 = vmatpush1.bf16.msra.mxu0 0
  %1386 = vmatprep.subr.bf16.mxu0 0
  %1387 = vmatpush1.bf16.msra.mxu0 0
  %1388 = vmatprep.subr.bf16.mxu0 0
  %1389 = vmatpush1.bf16.msra.mxu0 0
  %1390 = vmatprep.subr.bf16.mxu0 0
  %1391 = vmatpush1.bf16.msra.mxu0 0
  %1392 = vmatprep.subr.bf16.mxu0 0
  %1393 = vmatpush1.bf16.msra.mxu0 0
  %1394 = vmatprep.mubr.bf16.mxu0 0
  %1395 = vmatmul.mubr.bf16.gmra.mrb[0].mxu0 %v1360
  %v1396 = vpop.f32.mrb[0].mxu0
  %v1397 = vadd.f32 0.0, %v1396
  %v1398 = vpop.f32.mrb[0].mxu0
  %v1399 = vpop.f32.mrb[0].mxu0
  %v1400 = vpop.f32.mrb[0].mxu0
  %1401 = vdwg.mxu0
  %v1408 = vunpack.c.l.b16 %v1054
  %v1409 = vunpack.c.l.b16 %v1055
  %v1410 = vunpack.c.l.b16 %v1056
  %v1411 = vunpack.c.l.b16 %v1057
  %v1412 = vunpack.c.l.b16 %v1058
  %v1413 = vunpack.c.l.b16 %v1059
  %v1414 = vpack.c.b16 %v1409, %v1408
  %v1415 = vpack.c.b16 %v1411, %v1410
  %v1416 = vpack.c.b16 %v1413, %v1412
  %v1421 = vsel %vm1114, %v1017, 0
  %1423 = vmatprep.subr.bf16.mxu0 0
  %1424 = vmatpush1.bf16.msra.mxu0 %v1414
  %1425 = vmatprep.subr.bf16.mxu0 0
  %1426 = vmatpush1.bf16.msra.mxu0 %v1415
  %1427 = vmatprep.subr.bf16.mxu0 0
  %1428 = vmatpush1.bf16.msra.mxu0 %v1416
  %1429 = vmatprep.subr.bf16.mxu0 0
  %1430 = vmatpush1.bf16.msra.mxu0 0
  %1431 = vmatprep.subr.bf16.mxu0 0
  %1432 = vmatpush1.bf16.msra.mxu0 0
  %1433 = vmatprep.subr.bf16.mxu0 0
  %1434 = vmatpush1.bf16.msra.mxu0 0
  %1435 = vmatprep.subr.bf16.mxu0 0
  %1436 = vmatpush1.bf16.msra.mxu0 0
  %1437 = vmatprep.subr.bf16.mxu0 0
  %1438 = vmatpush1.bf16.msra.mxu0 0
  %1439 = vmatprep.subr.bf16.mxu0 0
  %1440 = vmatpush1.bf16.msra.mxu0 0
  %1441 = vmatprep.subr.bf16.mxu0 0
  %1442 = vmatpush1.bf16.msra.mxu0 0
  %1443 = vmatprep.subr.bf16.mxu0 0
  %1444 = vmatpush1.bf16.msra.mxu0 0
  %1445 = vmatprep.subr.bf16.mxu0 0
  %1446 = vmatpush1.bf16.msra.mxu0 0
  %1447 = vmatprep.subr.bf16.mxu0 0
  %1448 = vmatpush1.bf16.msra.mxu0 0
  %1449 = vmatprep.subr.bf16.mxu0 0
  %1450 = vmatpush1.bf16.msra.mxu0 0
  %1451 = vmatprep.subr.bf16.mxu0 0
  %1452 = vmatpush1.bf16.msra.mxu0 0
  %1453 = vmatprep.subr.bf16.mxu0 0
  %1454 = vmatpush1.bf16.msra.mxu0 0
  %1455 = vmatprep.mubr.bf16.mxu0 0
  %1456 = vmatmul.mubr.bf16.gmra.mrb[0].mxu0 %v1421
  %v1457 = vpop.f32.mrb[0].mxu0
  %v1458 = vadd.f32 0.0, %v1457
  %v1459 = vpop.f32.mrb[0].mxu0
  %v1460 = vpop.f32.mrb[0].mxu0
  %v1461 = vpop.f32.mrb[0].mxu0
  %1462 = vdwg.mxu0
  %v1469 = vunpack.c.l.b16 %v1060
  %v1470 = vunpack.c.l.b16 %v1061
  %v1471 = vunpack.c.l.b16 %v1062
  %v1472 = vunpack.c.l.b16 %v1063
  %v1473 = vunpack.c.l.b16 %v1064
  %v1474 = vunpack.c.l.b16 %v1065
  %v1475 = vpack.c.b16 %v1470, %v1469
  %v1476 = vpack.c.b16 %v1472, %v1471
  %v1477 = vpack.c.b16 %v1474, %v1473
  %v1482 = vsel %vm1114, %v1018, 0
  %1484 = vmatprep.subr.bf16.mxu0 0
  %1485 = vmatpush1.bf16.msra.mxu0 %v1475
  %1486 = vmatprep.subr.bf16.mxu0 0
  %1487 = vmatpush1.bf16.msra.mxu0 %v1476
  %1488 = vmatprep.subr.bf16.mxu0 0
  %1489 = vmatpush1.bf16.msra.mxu0 %v1477
  %1490 = vmatprep.subr.bf16.mxu0 0
  %1491 = vmatpush1.bf16.msra.mxu0 0
  %1492 = vmatprep.subr.bf16.mxu0 0
  %1493 = vmatpush1.bf16.msra.mxu0 0
  %1494 = vmatprep.subr.bf16.mxu0 0
  %1495 = vmatpush1.bf16.msra.mxu0 0
  %1496 = vmatprep.subr.bf16.mxu0 0
  %1497 = vmatpush1.bf16.msra.mxu0 0
  %1498 = vmatprep.subr.bf16.mxu0 0
  %1499 = vmatpush1.bf16.msra.mxu0 0
  %1500 = vmatprep.subr.bf16.mxu0 0
  %1501 = vmatpush1.bf16.msra.mxu0 0
  %1502 = vmatprep.subr.bf16.mxu0 0
  %1503 = vmatpush1.bf16.msra.mxu0 0
  %1504 = vmatprep.subr.bf16.mxu0 0
  %1505 = vmatpush1.bf16.msra.mxu0 0
  %1506 = vmatprep.subr.bf16.mxu0 0
  %1507 = vmatpush1.bf16.msra.mxu0 0
  %1508 = vmatprep.subr.bf16.mxu0 0
  %1509 = vmatpush1.bf16.msra.mxu0 0
  %1510 = vmatprep.subr.bf16.mxu0 0
  %1511 = vmatpush1.bf16.msra.mxu0 0
  %1512 = vmatprep.subr.bf16.mxu0 0
  %1513 = vmatpush1.bf16.msra.mxu0 0
  %1514 = vmatprep.subr.bf16.mxu0 0
  %1515 = vmatpush1.bf16.msra.mxu0 0
  %1516 = vmatprep.mubr.bf16.mxu0 0
  %1517 = vmatmul.mubr.bf16.gmra.mrb[0].mxu0 %v1482
  %v1518 = vpop.f32.mrb[0].mxu0
  %v1519 = vadd.f32 0.0, %v1518
  %v1520 = vpop.f32.mrb[0].mxu0
  %v1521 = vpop.f32.mrb[0].mxu0
  %v1522 = vpop.f32.mrb[0].mxu0
  %1523 = vdwg.mxu0
  %v1530 = vunpack.c.l.b16 %v1066
  %v1531 = vunpack.c.l.b16 %v1067
  %v1532 = vunpack.c.l.b16 %v1068
  %v1533 = vunpack.c.l.b16 %v1069
  %v1534 = vunpack.c.l.b16 %v1070
  %v1535 = vunpack.c.l.b16 %v1071
  %v1536 = vpack.c.b16 %v1531, %v1530
  %v1537 = vpack.c.b16 %v1533, %v1532
  %v1538 = vpack.c.b16 %v1535, %v1534
  %v1543 = vsel %vm1114, %v1019, 0
  %1545 = vmatprep.subr.bf16.mxu0 0
  %1546 = vmatpush1.bf16.msra.mxu0 %v1536
  %1547 = vmatprep.subr.bf16.mxu0 0
  %1548 = vmatpush1.bf16.msra.mxu0 %v1537
  %1549 = vmatprep.subr.bf16.mxu0 0
  %1550 = vmatpush1.bf16.msra.mxu0 %v1538
  %1551 = vmatprep.subr.bf16.mxu0 0
  %1552 = vmatpush1.bf16.msra.mxu0 0
  %1553 = vmatprep.subr.bf16.mxu0 0
  %1554 = vmatpush1.bf16.msra.mxu0 0
  %1555 = vmatprep.subr.bf16.mxu0 0
  %1556 = vmatpush1.bf16.msra.mxu0 0
  %1557 = vmatprep.subr.bf16.mxu0 0
  %1558 = vmatpush1.bf16.msra.mxu0 0
  %1559 = vmatprep.subr.bf16.mxu0 0
  %1560 = vmatpush1.bf16.msra.mxu0 0
  %1561 = vmatprep.subr.bf16.mxu0 0
  %1562 = vmatpush1.bf16.msra.mxu0 0
  %1563 = vmatprep.subr.bf16.mxu0 0
  %1564 = vmatpush1.bf16.msra.mxu0 0
  %1565 = vmatprep.subr.bf16.mxu0 0
  %1566 = vmatpush1.bf16.msra.mxu0 0
  %1567 = vmatprep.subr.bf16.mxu0 0
  %1568 = vmatpush1.bf16.msra.mxu0 0
  %1569 = vmatprep.subr.bf16.mxu0 0
  %1570 = vmatpush1.bf16.msra.mxu0 0
  %1571 = vmatprep.subr.bf16.mxu0 0
  %1572 = vmatpush1.bf16.msra.mxu0 0
  %1573 = vmatprep.subr.bf16.mxu0 0
  %1574 = vmatpush1.bf16.msra.mxu0 0
  %1575 = vmatprep.subr.bf16.mxu0 0
  %1576 = vmatpush1.bf16.msra.mxu0 0
  %1577 = vmatprep.mubr.bf16.mxu0 0
  %1578 = vmatmul.mubr.bf16.gmra.mrb[0].mxu0 %v1543
  %v1579 = vpop.f32.mrb[0].mxu0
  %v1580 = vadd.f32 0.0, %v1579
  %v1581 = vpop.f32.mrb[0].mxu0
  %v1582 = vpop.f32.mrb[0].mxu0
  %v1583 = vpop.f32.mrb[0].mxu0
  %1584 = vdwg.mxu0
  %v1591 = vunpack.c.l.b16 %v1072
  %v1592 = vunpack.c.l.b16 %v1073
  %v1593 = vunpack.c.l.b16 %v1074
  %v1594 = vunpack.c.l.b16 %v1075
  %v1595 = vunpack.c.l.b16 %v1076
  %v1596 = vunpack.c.l.b16 %v1077
  %v1597 = vpack.c.b16 %v1592, %v1591
  %v1598 = vpack.c.b16 %v1594, %v1593
  %v1599 = vpack.c.b16 %v1596, %v1595
  %v1604 = vsel %vm1114, %v1020, 0
  %1606 = vmatprep.subr.bf16.mxu0 0
  %1607 = vmatpush1.bf16.msra.mxu0 %v1597
  %1608 = vmatprep.subr.bf16.mxu0 0
  %1609 = vmatpush1.bf16.msra.mxu0 %v1598
  %1610 = vmatprep.subr.bf16.mxu0 0
  %1611 = vmatpush1.bf16.msra.mxu0 %v1599
  %1612 = vmatprep.subr.bf16.mxu0 0
  %1613 = vmatpush1.bf16.msra.mxu0 0
  %1614 = vmatprep.subr.bf16.mxu0 0
  %1615 = vmatpush1.bf16.msra.mxu0 0
  %1616 = vmatprep.subr.bf16.mxu0 0
  %1617 = vmatpush1.bf16.msra.mxu0 0
  %1618 = vmatprep.subr.bf16.mxu0 0
  %1619 = vmatpush1.bf16.msra.mxu0 0
  %1620 = vmatprep.subr.bf16.mxu0 0
  %1621 = vmatpush1.bf16.msra.mxu0 0
  %1622 = vmatprep.subr.bf16.mxu0 0
  %1623 = vmatpush1.bf16.msra.mxu0 0
  %1624 = vmatprep.subr.bf16.mxu0 0
  %1625 = vmatpush1.bf16.msra.mxu0 0
  %1626 = vmatprep.subr.bf16.mxu0 0
  %1627 = vmatpush1.bf16.msra.mxu0 0
  %1628 = vmatprep.subr.bf16.mxu0 0
  %1629 = vmatpush1.bf16.msra.mxu0 0
  %1630 = vmatprep.subr.bf16.mxu0 0
  %1631 = vmatpush1.bf16.msra.mxu0 0
  %1632 = vmatprep.subr.bf16.mxu0 0
  %1633 = vmatpush1.bf16.msra.mxu0 0
  %1634 = vmatprep.subr.bf16.mxu0 0
  %1635 = vmatpush1.bf16.msra.mxu0 0
  %1636 = vmatprep.subr.bf16.mxu0 0
  %1637 = vmatpush1.bf16.msra.mxu0 0
  %1638 = vmatprep.mubr.bf16.mxu0 0
  %1639 = vmatmul.mubr.bf16.gmra.mrb[0].mxu0 %v1604
  %v1640 = vpop.f32.mrb[0].mxu0
  %v1641 = vadd.f32 0.0, %v1640
  %v1642 = vpop.f32.mrb[0].mxu0
  %v1643 = vpop.f32.mrb[0].mxu0
  %v1644 = vpop.f32.mrb[0].mxu0
  %1645 = vdwg.mxu0
  %v1652 = vunpack.c.l.b16 %v1078
  %v1653 = vunpack.c.l.b16 %v1079
  %v1654 = vunpack.c.l.b16 %v1080
  %v1655 = vunpack.c.l.b16 %v1081
  %v1656 = vunpack.c.l.b16 %v1082
  %v1657 = vunpack.c.l.b16 %v1083
  %v1658 = vpack.c.b16 %v1653, %v1652
  %v1659 = vpack.c.b16 %v1655, %v1654
  %v1660 = vpack.c.b16 %v1657, %v1656
  %v1665 = vsel %vm1114, %v1021, 0
  %1667 = vmatprep.subr.bf16.mxu0 0
  %1668 = vmatpush1.bf16.msra.mxu0 %v1658
  %1669 = vmatprep.subr.bf16.mxu0 0
  %1670 = vmatpush1.bf16.msra.mxu0 %v1659
  %1671 = vmatprep.subr.bf16.mxu0 0
  %1672 = vmatpush1.bf16.msra.mxu0 %v1660
  %1673 = vmatprep.subr.bf16.mxu0 0
  %1674 = vmatpush1.bf16.msra.mxu0 0
  %1675 = vmatprep.subr.bf16.mxu0 0
  %1676 = vmatpush1.bf16.msra.mxu0 0
  %1677 = vmatprep.subr.bf16.mxu0 0
  %1678 = vmatpush1.bf16.msra.mxu0 0
  %1679 = vmatprep.subr.bf16.mxu0 0
  %1680 = vmatpush1.bf16.msra.mxu0 0
  %1681 = vmatprep.subr.bf16.mxu0 0
  %1682 = vmatpush1.bf16.msra.mxu0 0
  %1683 = vmatprep.subr.bf16.mxu0 0
  %1684 = vmatpush1.bf16.msra.mxu0 0
  %1685 = vmatprep.subr.bf16.mxu0 0
  %1686 = vmatpush1.bf16.msra.mxu0 0
  %1687 = vmatprep.subr.bf16.mxu0 0
  %1688 = vmatpush1.bf16.msra.mxu0 0
  %1689 = vmatprep.subr.bf16.mxu0 0
  %1690 = vmatpush1.bf16.msra.mxu0 0
  %1691 = vmatprep.subr.bf16.mxu0 0
  %1692 = vmatpush1.bf16.msra.mxu0 0
  %1693 = vmatprep.subr.bf16.mxu0 0
  %1694 = vmatpush1.bf16.msra.mxu0 0
  %1695 = vmatprep.subr.bf16.mxu0 0
  %1696 = vmatpush1.bf16.msra.mxu0 0
  %1697 = vmatprep.subr.bf16.mxu0 0
  %1698 = vmatpush1.bf16.msra.mxu0 0
  %1699 = vmatprep.mubr.bf16.mxu0 0
  %1700 = vmatmul.mubr.bf16.gmra.mrb[0].mxu0 %v1665
  %v1701 = vpop.f32.mrb[0].mxu0
  %v1702 = vadd.f32 0.0, %v1701
  %v1703 = vpop.f32.mrb[0].mxu0
  %v1704 = vpop.f32.mrb[0].mxu0
  %v1705 = vpop.f32.mrb[0].mxu0
  %1706 = vdwg.mxu0
  %v1713 = vunpack.c.l.b16 %v1084
  %v1714 = vunpack.c.l.b16 %v1085
  %v1715 = vunpack.c.l.b16 %v1086
  %v1716 = vunpack.c.l.b16 %v1087
  %v1717 = vunpack.c.l.b16 %v1088
  %v1718 = vunpack.c.l.b16 %v1089
  %v1719 = vpack.c.b16 %v1714, %v1713
  %v1720 = vpack.c.b16 %v1716, %v1715
  %v1721 = vpack.c.b16 %v1718, %v1717
  %v1726 = vsel %vm1114, %v1022, 0
  %1728 = vmatprep.subr.bf16.mxu0 0
  %1729 = vmatpush1.bf16.msra.mxu0 %v1719
  %1730 = vmatprep.subr.bf16.mxu0 0
  %1731 = vmatpush1.bf16.msra.mxu0 %v1720
  %1732 = vmatprep.subr.bf16.mxu0 0
  %1733 = vmatpush1.bf16.msra.mxu0 %v1721
  %1734 = vmatprep.subr.bf16.mxu0 0
  %1735 = vmatpush1.bf16.msra.mxu0 0
  %1736 = vmatprep.subr.bf16.mxu0 0
  %1737 = vmatpush1.bf16.msra.mxu0 0
  %1738 = vmatprep.subr.bf16.mxu0 0
  %1739 = vmatpush1.bf16.msra.mxu0 0
  %1740 = vmatprep.subr.bf16.mxu0 0
  %1741 = vmatpush1.bf16.msra.mxu0 0
  %1742 = vmatprep.subr.bf16.mxu0 0
  %1743 = vmatpush1.bf16.msra.mxu0 0
  %1744 = vmatprep.subr.bf16.mxu0 0
  %1745 = vmatpush1.bf16.msra.mxu0 0
  %1746 = vmatprep.subr.bf16.mxu0 0
  %1747 = vmatpush1.bf16.msra.mxu0 0
  %1748 = vmatprep.subr.bf16.mxu0 0
  %1749 = vmatpush1.bf16.msra.mxu0 0
  %1750 = vmatprep.subr.bf16.mxu0 0
  %1751 = vmatpush1.bf16.msra.mxu0 0
  %1752 = vmatprep.subr.bf16.mxu0 0
  %1753 = vmatpush1.bf16.msra.mxu0 0
  %1754 = vmatprep.subr.bf16.mxu0 0
  %1755 = vmatpush1.bf16.msra.mxu0 0
  %1756 = vmatprep.subr.bf16.mxu0 0
  %1757 = vmatpush1.bf16.msra.mxu0 0
  %1758 = vmatprep.subr.bf16.mxu0 0
  %1759 = vmatpush1.bf16.msra.mxu0 0
  %1760 = vmatprep.mubr.bf16.mxu0 0
  %1761 = vmatmul.mubr.bf16.gmra.mrb[0].mxu0 %v1726
  %v1762 = vpop.f32.mrb[0].mxu0
  %v1763 = vadd.f32 0.0, %v1762
  %v1764 = vpop.f32.mrb[0].mxu0
  %v1765 = vpop.f32.mrb[0].mxu0
  %v1766 = vpop.f32.mrb[0].mxu0
  %1767 = vdwg.mxu0
  %v1774 = vunpack.c.l.b16 %v1090
  %v1775 = vunpack.c.l.b16 %v1091
  %v1776 = vunpack.c.l.b16 %v1092
  %v1777 = vunpack.c.l.b16 %v1093
  %v1778 = vunpack.c.l.b16 %v1094
  %v1779 = vunpack.c.l.b16 %v1095
  %v1780 = vpack.c.b16 %v1775, %v1774
  %v1781 = vpack.c.b16 %v1777, %v1776
  %v1782 = vpack.c.b16 %v1779, %v1778
  %v1787 = vsel %vm1114, %v1023, 0
  %1789 = vmatprep.subr.bf16.mxu0 0
  %1790 = vmatpush1.bf16.msra.mxu0 %v1780
  %1791 = vmatprep.subr.bf16.mxu0 0
  %1792 = vmatpush1.bf16.msra.mxu0 %v1781
  %1793 = vmatprep.subr.bf16.mxu0 0
  %1794 = vmatpush1.bf16.msra.mxu0 %v1782
  %1795 = vmatprep.subr.bf16.mxu0 0
  %1796 = vmatpush1.bf16.msra.mxu0 0
  %1797 = vmatprep.subr.bf16.mxu0 0
  %1798 = vmatpush1.bf16.msra.mxu0 0
  %1799 = vmatprep.subr.bf16.mxu0 0
  %1800 = vmatpush1.bf16.msra.mxu0 0
  %1801 = vmatprep.subr.bf16.mxu0 0
  %1802 = vmatpush1.bf16.msra.mxu0 0
  %1803 = vmatprep.subr.bf16.mxu0 0
  %1804 = vmatpush1.bf16.msra.mxu0 0
  %1805 = vmatprep.subr.bf16.mxu0 0
  %1806 = vmatpush1.bf16.msra.mxu0 0
  %1807 = vmatprep.subr.bf16.mxu0 0
  %1808 = vmatpush1.bf16.msra.mxu0 0
  %1809 = vmatprep.subr.bf16.mxu0 0
  %1810 = vmatpush1.bf16.msra.mxu0 0
  %1811 = vmatprep.subr.bf16.mxu0 0
  %1812 = vmatpush1.bf16.msra.mxu0 0
  %1813 = vmatprep.subr.bf16.mxu0 0
  %1814 = vmatpush1.bf16.msra.mxu0 0
  %1815 = vmatprep.subr.bf16.mxu0 0
  %1816 = vmatpush1.bf16.msra.mxu0 0
  %1817 = vmatprep.subr.bf16.mxu0 0
  %1818 = vmatpush1.bf16.msra.mxu0 0
  %1819 = vmatprep.subr.bf16.mxu0 0
  %1820 = vmatpush1.bf16.msra.mxu0 0
  %1821 = vmatprep.mubr.bf16.mxu0 0
  %1822 = vmatmul.mubr.bf16.gmra.mrb[0].mxu0 %v1787
  %v1823 = vpop.f32.mrb[0].mxu0
  %v1824 = vadd.f32 0.0, %v1823
  %v1825 = vpop.f32.mrb[0].mxu0
  %v1826 = vpop.f32.mrb[0].mxu0
  %v1827 = vpop.f32.mrb[0].mxu0
  %1828 = vdwg.mxu0
  %vm1829 = vcmask 982016
  %v1830 = vsel %vm1829, %v1153, 0.0
  %v1831 = vsel %vm1829, %v1214, 0.0
  %v1832 = vadd.f32 %v1830, %v1831
  %v1833 = vsel %vm1829, %v1275, 0.0
  %v1834 = vadd.f32 %v1832, %v1833
  %v1835 = vsel %vm1829, %v1336, 0.0
  %v1836 = vadd.f32 %v1834, %v1835
  %v1837 = vsel %vm1829, %v1397, 0.0
  %v1838 = vadd.f32 %v1836, %v1837
  %v1839 = vsel %vm1829, %v1458, 0.0
  %v1840 = vadd.f32 %v1838, %v1839
  %v1841 = vsel %vm1829, %v1519, 0.0
  %v1842 = vadd.f32 %v1840, %v1841
  %v1843 = vsel %vm1829, %v1580, 0.0
  %v1844 = vadd.f32 %v1842, %v1843
  %v1845 = vsel %vm1829, %v1641, 0.0
  %v1846 = vadd.f32 %v1844, %v1845
  %v1847 = vsel %vm1829, %v1702, 0.0
  %v1848 = vadd.f32 %v1846, %v1847
  %v1849 = vsel %vm1829, %v1763, 0.0
  %v1850 = vadd.f32 %v1848, %v1849
  %v1851 = vsel %vm1829, %v1824, 0.0
  %v1852 = vadd.f32 %v1850, %v1851
  %v1853 = vld [vmem:[%s6] sm:$0x1]
  %v1855 = vlaneseq
  %v1856 = vshrl.u32 %v1855, 7
  %v1857 = vsub.s32 0, %v1856
  %v1858 = vrot.slane %v1853, %v1857
  %v1860 = vadd.f32 %v1852, %v1858
  %v1861 = vmax.f32 %v1860, 0.0
  %v1862 = vpack.c.bf16 %v1861, %v1861
  %v1863 = vld [vmem:[%s7] sm:$0xf]
  %v1864 = vld [vmem:[%s7 + $0x4] sm:$0xf]
  %v1865 = vld [vmem:[%s7 + $0x8] sm:$0xf]
  %v1866 = vld [vmem:[%s7 + $0xc] sm:$0xf]
  %v1867 = vld [vmem:[%s7 + $0x10] sm:$0xf]
  %v1868 = vld [vmem:[%s7 + $0x14] sm:$0xf]
  %v1869 = vld [vmem:[%s7 + $0x18] sm:$0xf]
  %v1870 = vld [vmem:[%s7 + $0x1c] sm:$0xf]
  %v1871 = vld [vmem:[%s7 + $0x20] sm:$0xf]
  %v1872 = vld [vmem:[%s7 + $0x24] sm:$0xf]
  %v1873 = vld [vmem:[%s7 + $0x28] sm:$0xf]
  %v1874 = vld [vmem:[%s7 + $0x2c] sm:$0xf]
  %v1875 = vld [vmem:[%s7 + $0x30] sm:$0xf]
  %v1876 = vld [vmem:[%s7 + $0x34] sm:$0xf]
  %v1877 = vld [vmem:[%s7 + $0x38] sm:$0xf]
  %v1878 = vld [vmem:[%s8] sm:$0x1]
  %v1880 = vlaneseq
  %v1881 = vshrl.u32 %v1880, 7
  %v1882 = vsub.s32 0, %v1881
  %v1883 = vrot.slane %v1878, %v1882
  %v1900 = vunpack.c.l.b16 %v1863
  %v1901 = vunpack.c.l.b16 %v1864
  %v1902 = vunpack.c.l.b16 %v1865
  %v1903 = vunpack.c.l.b16 %v1866
  %v1904 = vunpack.c.l.b16 %v1867
  %v1905 = vunpack.c.l.b16 %v1868
  %v1906 = vunpack.c.l.b16 %v1869
  %v1907 = vunpack.c.l.b16 %v1870
  %v1908 = vunpack.c.l.b16 %v1871
  %v1909 = vunpack.c.l.b16 %v1872
  %v1910 = vunpack.c.l.b16 %v1873
  %v1911 = vunpack.c.l.b16 %v1874
  %v1912 = vunpack.c.l.b16 %v1875
  %v1913 = vunpack.c.l.b16 %v1876
  %v1914 = vunpack.c.l.b16 %v1877
  %v1915 = vpack.c.b16 %v1901, %v1900
  %v1916 = vpack.c.b16 %v1903, %v1902
  %v1917 = vpack.c.b16 %v1905, %v1904
  %v1918 = vpack.c.b16 %v1907, %v1906
  %v1919 = vpack.c.b16 %v1909, %v1908
  %v1920 = vpack.c.b16 %v1911, %v1910
  %v1921 = vpack.c.b16 %v1913, %v1912
  %v1922 = vpack.c.b16 %v1914, %v1914
  %v1931 = vsel %vm1829, %v1862, 0
  %v1934 = vsel %vm645, %v1922, 0
  %1936 = vmatprep.subr.bf16.mxu0 0
  %1937 = vmatpush1.bf16.msra.mxu0 %v1915
  %1938 = vmatprep.subr.bf16.mxu0 0
  %1939 = vmatpush1.bf16.msra.mxu0 %v1916
  %1940 = vmatprep.subr.bf16.mxu0 0
  %1941 = vmatpush1.bf16.msra.mxu0 %v1917
  %1942 = vmatprep.subr.bf16.mxu0 0
  %1943 = vmatpush1.bf16.msra.mxu0 %v1918
  %1944 = vmatprep.subr.bf16.mxu0 0
  %1945 = vmatpush1.bf16.msra.mxu0 %v1919
  %1946 = vmatprep.subr.bf16.mxu0 0
  %1947 = vmatpush1.bf16.msra.mxu0 %v1920
  %1948 = vmatprep.subr.bf16.mxu0 0
  %1949 = vmatpush1.bf16.msra.mxu0 %v1921
  %1950 = vmatprep.subr.bf16.mxu0 0
  %1951 = vmatpush1.bf16.msra.mxu0 %v1934
  %1952 = vmatprep.subr.bf16.mxu0 0
  %1953 = vmatpush1.bf16.msra.mxu0 0
  %1954 = vmatprep.subr.bf16.mxu0 0
  %1955 = vmatpush1.bf16.msra.mxu0 0
  %1956 = vmatprep.subr.bf16.mxu0 0
  %1957 = vmatpush1.bf16.msra.mxu0 0
  %1958 = vmatprep.subr.bf16.mxu0 0
  %1959 = vmatpush1.bf16.msra.mxu0 0
  %1960 = vmatprep.subr.bf16.mxu0 0
  %1961 = vmatpush1.bf16.msra.mxu0 0
  %1962 = vmatprep.subr.bf16.mxu0 0
  %1963 = vmatpush1.bf16.msra.mxu0 0
  %1964 = vmatprep.subr.bf16.mxu0 0
  %1965 = vmatpush1.bf16.msra.mxu0 0
  %1966 = vmatprep.subr.bf16.mxu0 0
  %1967 = vmatpush1.bf16.msra.mxu0 0
  %1968 = vmatprep.mubr.bf16.mxu0 0
  %1969 = vmatmul.mubr.bf16.gmra.mrb[0].mxu0 %v1931
  %v1970 = vpop.f32.mrb[0].mxu0
  %v1971 = vadd.f32 %v1883, %v1970
  %v1972 = vpop.f32.mrb[0].mxu0
  %v1973 = vpop.f32.mrb[0].mxu0
  %v1974 = vpop.f32.mrb[0].mxu0
  %1975 = vdwg.mxu0
  %v1976 = vmax.f32 %v1971, 0.0
  %v1977 = vpack.c.bf16 %v1976, %v1976
  %v1978 = vld [vmem:[%s9] sm:$0xf]
  %v1979 = vld [vmem:[%s9 + $0x4] sm:$0xf]
  %v1980 = vld [vmem:[%s9 + $0x8] sm:$0xf]
  %v1981 = vld [vmem:[%s9 + $0xc] sm:$0xf]
  %v1982 = vld [vmem:[%s9 + $0x10] sm:$0xf]
  %v1983 = vld [vmem:[%s9 + $0x14] sm:$0xf]
  %v1984 = vld [vmem:[%s9 + $0x18] sm:$0xf]
  %v1985 = vld [vmem:[%s9 + $0x1c] sm:$0xf]
  %v1986 = vld [vmem:[%s9 + $0x20] sm:$0xf]
  %v1987 = vld [vmem:[%s9 + $0x24] sm:$0xf]
  %v1988 = vld [vmem:[%s9 + $0x28] sm:$0x3]
  %v1989 = vld [vmem:[%s10] sm:$0x1]
  %v1991 = vlaneseq
  %v1992 = vshrl.u32 %v1991, 7
  %v1993 = vsub.s32 0, %v1992
  %v1994 = vrot.slane %v1989, %v1993
  %v2007 = vunpack.c.l.b16 %v1978
  %v2008 = vunpack.c.l.b16 %v1979
  %v2009 = vunpack.c.l.b16 %v1980
  %v2010 = vunpack.c.l.b16 %v1981
  %v2011 = vunpack.c.l.b16 %v1982
  %v2012 = vunpack.c.l.b16 %v1983
  %v2013 = vunpack.c.l.b16 %v1984
  %v2014 = vunpack.c.l.b16 %v1985
  %v2015 = vunpack.c.l.b16 %v1986
  %v2016 = vunpack.c.l.b16 %v1987
  %v2017 = vunpack.c.l.b16 %v1988
  %v2018 = vpack.c.b16 %v2008, %v2007
  %v2019 = vpack.c.b16 %v2010, %v2009
  %v2020 = vpack.c.b16 %v2012, %v2011
  %v2021 = vpack.c.b16 %v2014, %v2013
  %v2022 = vpack.c.b16 %v2016, %v2015
  %v2023 = vpack.c.b16 %v2017, %v2017
  %vm2029 = vcmask 687104
  %v2031 = vsel %vm2029, %v1977, 0
  %vm2033 = vcmask 1041408
  %v2035 = vsel %vm2033, %v2023, 0
  %2037 = vmatprep.subr.bf16.mxu0 0
  %2038 = vmatpush1.bf16.msra.mxu0 %v2018
  %2039 = vmatprep.subr.bf16.mxu0 0
  %2040 = vmatpush1.bf16.msra.mxu0 %v2019
  %2041 = vmatprep.subr.bf16.mxu0 0
  %2042 = vmatpush1.bf16.msra.mxu0 %v2020
  %2043 = vmatprep.subr.bf16.mxu0 0
  %2044 = vmatpush1.bf16.msra.mxu0 %v2021
  %2045 = vmatprep.subr.bf16.mxu0 0
  %2046 = vmatpush1.bf16.msra.mxu0 %v2022
  %2047 = vmatprep.subr.bf16.mxu0 0
  %2048 = vmatpush1.bf16.msra.mxu0 %v2035
  %2049 = vmatprep.subr.bf16.mxu0 0
  %2050 = vmatpush1.bf16.msra.mxu0 0
  %2051 = vmatprep.subr.bf16.mxu0 0
  %2052 = vmatpush1.bf16.msra.mxu0 0
  %2053 = vmatprep.subr.bf16.mxu0 0
  %2054 = vmatpush1.bf16.msra.mxu0 0
  %2055 = vmatprep.subr.bf16.mxu0 0
  %2056 = vmatpush1.bf16.msra.mxu0 0
  %2057 = vmatprep.subr.bf16.mxu0 0
  %2058 = vmatpush1.bf16.msra.mxu0 0
  %2059 = vmatprep.subr.bf16.mxu0 0
  %2060 = vmatpush1.bf16.msra.mxu0 0
  %2061 = vmatprep.subr.bf16.mxu0 0
  %2062 = vmatpush1.bf16.msra.mxu0 0
  %2063 = vmatprep.subr.bf16.mxu0 0
  %2064 = vmatpush1.bf16.msra.mxu0 0
  %2065 = vmatprep.subr.bf16.mxu0 0
  %2066 = vmatpush1.bf16.msra.mxu0 0
  %2067 = vmatprep.subr.bf16.mxu0 0
  %2068 = vmatpush1.bf16.msra.mxu0 0
  %2069 = vmatprep.mubr.bf16.mxu0 0
  %2070 = vmatmul.mubr.bf16.gmra.mrb[0].mxu0 %v2031
  %v2071 = vpop.f32.mrb[0].mxu0
  %v2072 = vadd.f32 %v1994, %v2071
  %v2073 = vpop.f32.mrb[0].mxu0
  %v2074 = vpop.f32.mrb[0].mxu0
  %v2075 = vpop.f32.mrb[0].mxu0
  %2076 = vdwg.mxu0
  %vm2077 = vcmask 48128
  %2078 = vst.msk [vmem:[%s11] sm:$0xff] %vm2077, %v2072
  // Predicated region
  $region46: #{qnetwork_forward.1} parent=0 // pred_check
    _
  $region47: #{qnetwork_forward.1} parent=0 // pred_check_branch
    %2080 = sbr.rel (0) target = $region49
  $region48: #{qnetwork_forward.1} parent=0 // pred_region
    _
  $region49: #{qnetwork_forward.1} parent=0 // pred_fallthru
    _
  // Predicated region
  $region50: #{qnetwork_forward.1} parent=0 // pred_check
    _
  $region51: #{qnetwork_forward.1} parent=0 // pred_check_branch
    %2082 = sbr.rel (0) target = $region53
  $region52: #{qnetwork_forward.1} parent=0 // pred_region
    _
  $region53: #{qnetwork_forward.1} parent=0 // pred_fallthru
    _

</llo_original>
